<compile_context>
chip_gen: v7x
topology: tpu7x:2x2x1
jax: 0.10.0
libtpu: 0.0.40
codegen_flags: <defaults>
</compile_context>

<pallas_src>
import jax
import jax.numpy as jnp
from jax import lax
from jax.experimental import pallas as pl
from jax.experimental.pallas import tpu as pltpu


def _round_up(x, m):
    return ((x + m - 1) // m) * m


def _self_attn_kernel(gamma_ref,          # SMEM (1,)             f32
                      xq_ref,             # VMEM (1, TQ, Cp)      f32   query-row tile (residual)
                      xf_ref,             # VMEM (1, N,  Cp)      bf16  full token set (per batch)
                      v_ref,              # VMEM (1, N,  Cp)      bf16  precomputed V (per batch)
                      wqk_ref,            # VMEM (Cp, Cp)         bf16  Wq @ Wk^T (padded)
                      bqk_ref,            # VMEM (1, Cp)          f32   bq @ Wk^T (padded)
                      out_ref,            # VMEM (1, TQ, Cp)      f32
                      attn_ref,           # VMEM (1, TQ, N)       attn_dtype
                      *, exact_softmax):
    xq_f32 = xq_ref[0]                               # (TQ, Cp) f32, kept for residual
    xq = xq_f32.astype(jnp.bfloat16)                 # (TQ, Cp) bf16
    xf = xf_ref[0]                                   # (N,  Cp) bf16 (pre-cast in wrapper)

    # --- energy with Wq*Wk^T folded -------------------------------------
    # Row-constant bias terms (x_i Wq bk^T and bq bk^T) are dropped: they
    # cancel exactly in the row softmax below.
    a = jnp.dot(xq, wqk_ref[...],
                preferred_element_type=jnp.float32) + bqk_ref[...]        # (TQ, Cp) f32
    energy = lax.dot_general(
        a.astype(jnp.bfloat16), xf,
        dimension_numbers=(((1,), (1,)), ((), ())),   # contract channel axis of both (no k.T)
        preferred_element_type=jnp.float32)                               # (TQ, N) f32

    # --- row softmax (f32) ----------------------------------------------
    m = jnp.max(energy, axis=-1, keepdims=True)
    p = jnp.exp(energy - m)
    denom = jnp.sum(p, axis=-1, keepdims=True)
    if exact_softmax:
        attn = p / denom
    else:
        attn = p * pl.reciprocal(denom, approx=True)                      # (TQ, N) f32

    # Cast to bf16 once; reuse for both the attention store (when bf16) and
    # the P @ V matmul operand.
    attn_bf16 = attn.astype(jnp.bfloat16)
    if attn_ref.dtype == jnp.bfloat16:
        attn_ref[0] = attn_bf16
    else:
        attn_ref[0] = attn.astype(attn_ref.dtype)

    # --- attention-weighted values (V precomputed in the wrapper) --------
    o = jnp.dot(attn_bf16, v_ref[0],
                preferred_element_type=jnp.float32)                       # (TQ, Cp) f32

    gamma = gamma_ref[0]
    out_ref[0] = (gamma * o + xq_f32).astype(out_ref.dtype)


def _vmem_need_bytes(tq, n, cp, attn_itemsize):
    """Rough VMEM footprint: double-buffered blocks + in-kernel temps."""
    return (
        2 * tq * cp * 4                 # xq tile (f32)
        + 2 * n * cp * 2                # xf (bf16)
        + 2 * n * cp * 2                # V (bf16)
        + 2 * (cp * cp * 2 + cp * 4)    # wqk (bf16) + bqk (f32)
        + 2 * tq * cp * 4               # out tile (f32)
        + 2 * tq * n * attn_itemsize    # attention tile
        + 4 * tq * n * 4                # energy / p / attn f32 temps
        + 2 * tq * cp * 4               # 'a' and 'o' temps
    )


def self_attn_pallas(x_nchw, params, *, tq=None, attn_dtype=jnp.float32,
                     exact_softmax=False):
    """x_nchw: (B, C, W, H) float32.  Returns (out (B,C,W,H), attention (B,N,N))."""
    B, C, W, H = x_nchw.shape
    N = W * H
    Cp = _round_up(C, 128)                       # lane-dense channel axis
    attn_itemsize = jnp.dtype(attn_dtype).itemsize

    # --- per-generation VMEM budget --------------------------------------
    try:
        vmem_capacity = int(pltpu.get_tpu_info().vmem_capacity_bytes)
    except Exception:
        vmem_capacity = 64 * 2**20               # conservative (v7x per-TC) fallback
    vmem_budget = int(0.75 * vmem_capacity)      # ~48 MiB on v7x, ~96 MiB on v5e/v6e

    try:
        device_kind = jax.devices()[0].device_kind.lower()
    except Exception:
        device_kind = ""
    prefer_256 = "v5" not in device_kind         # v5e: 128x128 MXU, keep 128-row tiles

    # --- query tile selection --------------------------------------------
    if tq is None:
        candidates = []
        if prefer_256 and N % 256 == 0 and N >= 256:
            candidates.append(256)
        if N % 128 == 0 and N > 128:
            candidates.append(128)
        candidates.append(N)
        tq = candidates[-1]
        for cand in candidates:
            if _vmem_need_bytes(cand, N, Cp, attn_itemsize) <= vmem_budget:
                tq = cand
                break
    assert N % tq == 0, "query tile must divide N"
    nq = N // tq

    # --- operand prep (wrapper-side, plain XLA) ---------------------------
    # NCHW -> (B, N, C), n = w*H + h (same flattening as torch .view).
    x_tok = jnp.transpose(x_nchw, (0, 2, 3, 1)).reshape(B, N, C).astype(jnp.float32)

    pad_c = Cp - C
    xq_full = jnp.pad(x_tok, ((0, 0), (0, 0), (0, pad_c)))                 # f32 (residual + Q)
    xf_bf16 = xq_full.astype(jnp.bfloat16)                                 # bf16 keys/tokens

    # Hoisted value projection: V = x Wv + bv, once per batch, then bf16.
    v_full = x_tok @ params["wv"] + params["bv"]                           # (B, N, C) f32
    v_full = jnp.pad(v_full, ((0, 0), (0, 0), (0, pad_c))).astype(jnp.bfloat16)

    # Folded Q/K projections (parameter-only transforms, done once).
    wqk = params["wq"] @ params["wk"].T                                    # (C, C)
    bqk = params["bq"] @ params["wk"].T                                    # (1, C)
    wqk = jnp.pad(wqk, ((0, pad_c), (0, pad_c))).astype(jnp.bfloat16)
    bqk = jnp.pad(bqk, ((0, 0), (0, pad_c))).astype(jnp.float32)

    # --- VMEM limit & cost estimate ---------------------------------------
    vmem_need = _vmem_need_bytes(tq, N, Cp, attn_itemsize)
    vmem_limit = int(min(max(2 * vmem_need, 32 * 2**20), vmem_budget))

    cost = pl.CostEstimate(
        flops=int(2 * B * (N * Cp * Cp            # x @ (Wq Wk^T) over all q tiles
                           + 2 * N * N * Cp)),    # energy + attn @ V
        transcendentals=int(B * N * N),
        bytes_accessed=int(
            B * N * Cp * 4                        # xq f32 read (tiles sum to full x)
            + 2 * B * N * Cp * 2                  # xf + V bf16 reads (once per batch)
            + B * N * Cp * 4                      # out writeback
            + B * N * N * attn_itemsize           # attention writeback
            + Cp * Cp * 2 + Cp * 4),              # folded weights
    )

    grid = (B, nq)
    kernel = pl.pallas_call(
        lambda *refs: _self_attn_kernel(*refs, exact_softmax=exact_softmax),
        out_shape=(
            jax.ShapeDtypeStruct((B, N, Cp), jnp.float32),
            jax.ShapeDtypeStruct((B, N, N), attn_dtype),
        ),
        grid=grid,
        in_specs=[
            pl.BlockSpec(memory_space=pltpu.SMEM),                     # gamma
            pl.BlockSpec((1, tq, Cp), lambda b, qi: (b, qi, 0)),       # x_q tile (f32)
            pl.BlockSpec((1, N, Cp), lambda b, qi: (b, 0, 0)),         # x_full (bf16, once per b)
            pl.BlockSpec((1, N, Cp), lambda b, qi: (b, 0, 0)),         # V (bf16, once per b)
            pl.BlockSpec((Cp, Cp), lambda b, qi: (0, 0)),              # wqk
            pl.BlockSpec((1, Cp), lambda b, qi: (0, 0)),               # bqk
        ],
        out_specs=(
            pl.BlockSpec((1, tq, Cp), lambda b, qi: (b, qi, 0)),       # out (lane-dense Cp)
            pl.BlockSpec((1, tq, N), lambda b, qi: (b, qi, 0)),        # attention rows
        ),
        compiler_params=pltpu.CompilerParams(
            dimension_semantics=("parallel", "parallel"),
            vmem_limit_bytes=vmem_limit,
        ),
        cost_estimate=cost,
    )

    out_flat, attn = kernel(params["gamma"], xq_full, xf_bf16, v_full, wqk, bqk)

    out = jnp.transpose(out_flat[..., :C].reshape(B, W, H, C), (0, 3, 1, 2))
    return out, attn


def self_attn_reference(x_nchw, params):
    """Pure-JAX (f32) reference matching the PyTorch forward exactly."""
    B, C, W, H = x_nchw.shape
    N = W * H
    x_flat = x_nchw.reshape(B, C, N)                                    # (B, C, N)
    q = jnp.einsum("bcn,ck->bkn", x_flat, params["wq"]) + params["bq"][0][None, :, None]
    k = jnp.einsum("bcn,ck->bkn", x_flat, params["wk"]) + params["bk"][0][None, :, None]
    v = jnp.einsum("bcn,ck->bkn", x_flat, params["wv"]) + params["bv"][0][None, :, None]
    energy = jnp.einsum("bkn,bkm->bnm", q, k)                           # (B, N, N)
    attn = jax.nn.softmax(energy, axis=-1)
    out = jnp.einsum("bcn,bmn->bcm", v, attn)                           # (B, C, N)
    out = out.reshape(B, C, W, H)
    out = params["gamma"][0] * out + x_nchw
    return out, attn


def make_params(key, in_dim):
    """Deterministic parameter init; weights stored as (C_in, C_out)."""
    cq = in_dim // 8
    k1, k2, k3, k4, k5, k6 = jax.random.split(key, 6)
    scale = 0.1
    return {
        "wq": scale * jax.random.normal(k1, (in_dim, cq), jnp.float32),
        "bq": scale * jax.random.normal(k2, (1, cq), jnp.float32),
        "wk": scale * jax.random.normal(k3, (in_dim, cq), jnp.float32),
        "bk": scale * jax.random.normal(k4, (1, cq), jnp.float32),
        "wv": scale * jax.random.normal(k5, (in_dim, in_dim), jnp.float32),
        "bv": scale * jax.random.normal(k6, (1, in_dim), jnp.float32),
        # nn.Parameter(torch.zeros(1)) — gamma initialized to 0 exactly as in the module.
        "gamma": jnp.zeros((1,), jnp.float32),
    }


if __name__ == "__main__":
    B, C, W, H = 2, 16, 16, 16      # in_dim=16 so query/key channels = 16//8 = 2; N = 256
    key = jax.random.PRNGKey(0)
    kx, kp = jax.random.split(key)
    x = jax.random.normal(kx, (B, C, W, H), jnp.float32)
    params = make_params(kp, C)
    # Use a nonzero gamma in the test so the attention branch of `out` is
    # actually exercised (the module's zero init would mask it).
    params["gamma"] = jnp.array([0.5], jnp.float32)

    out, attn = jax.jit(self_attn_pallas)(x, params)
    out = jax.block_until_ready(out)
    attn = jax.block_until_ready(attn)

    out_ref, attn_ref = self_attn_reference(x, params)
    # bf16 MXU operands + approx reciprocal -> compare against the f32
    # reference with correspondingly relaxed tolerances.
    assert jnp.allclose(out, out_ref, atol=2e-2, rtol=2e-2), "out mismatch"
    assert jnp.allclose(attn, attn_ref, atol=2e-3, rtol=5e-2), "attention mismatch"

    print("KERNEL_OK")
</pallas_src>

<mosaic_0001>
module attributes {stable_mosaic.version = 11 : i64} {
  func.func @_lambda_(%arg0: i32, %arg1: i32, %arg2: memref<1xf32, #tpu.memory_space<smem>>, %arg3: memref<1x256x128xf32, #tpu.memory_space<vmem>>, %arg4: memref<1x256x128xbf16, #tpu.memory_space<vmem>>, %arg5: memref<1x256x128xbf16, #tpu.memory_space<vmem>>, %arg6: memref<128x128xbf16, #tpu.memory_space<vmem>>, %arg7: memref<1x128xf32, #tpu.memory_space<vmem>>, %arg8: memref<1x256x128xf32, #tpu.memory_space<vmem>>, %arg9: memref<1x256x256xf32, #tpu.memory_space<vmem>>) attributes {dimension_semantics = [#tpu.dimension_semantics<parallel>, #tpu.dimension_semantics<parallel>], iteration_bounds = array<i64: 2, 1>, scalar_prefetch = 0 : i64, scratch_operands = 0 : i64, tpu.core_type = #tpu.core_type<tc>, window_params = [{transform_indices = @transform_0, window_bounds = array<i64: 1>}, {transform_indices = @transform_1, window_bounds = array<i64: 1, 256, 128>}, {transform_indices = @transform_2, window_bounds = array<i64: 1, 256, 128>}, {transform_indices = @transform_3, window_bounds = array<i64: 1, 256, 128>}, {pipeline_mode = #tpu.pipeline_mode<synchronous>, transform_indices = @transform_4, window_bounds = array<i64: 128, 128>}, {pipeline_mode = #tpu.pipeline_mode<synchronous>, transform_indices = @transform_5, window_bounds = array<i64: 1, 128>}, {transform_indices = @transform_6, window_bounds = array<i64: 1, 256, 128>}, {transform_indices = @transform_7, window_bounds = array<i64: 1, 256, 256>}]} {
    %c0 = arith.constant 0 : index
    %c0_0 = arith.constant 0 : index
    %c0_1 = arith.constant 0 : index
    %0 = vector.load %arg3[%c0, %c0_0, %c0_1] : memref<1x256x128xf32, #tpu.memory_space<vmem>>, vector<1x256x128xf32>
    %1 = vector.shape_cast %0 : vector<1x256x128xf32> to vector<256x128xf32>
    %2 = arith.truncf %1 : vector<256x128xf32> to vector<256x128xbf16>
    %c0_2 = arith.constant 0 : index
    %c0_3 = arith.constant 0 : index
    %c0_4 = arith.constant 0 : index
    %3 = vector.load %arg4[%c0_2, %c0_3, %c0_4] : memref<1x256x128xbf16, #tpu.memory_space<vmem>>, vector<1x256x128xbf16>
    %4 = vector.shape_cast %3 : vector<1x256x128xbf16> to vector<256x128xbf16>
    %c0_5 = arith.constant 0 : index
    %c0_6 = arith.constant 0 : index
    %5 = vector.load %arg6[%c0_5, %c0_6] : memref<128x128xbf16, #tpu.memory_space<vmem>>, vector<128x128xbf16>
    %cst = arith.constant dense<0.000000e+00> : vector<256x128xf32>
    %6 = tpu.matmul %2, %5, %cst {dimension_numbers = #tpu.dot_dimension_numbers<[1], [0], [0], [1], [0, 0, 1, 1], [], []>} : vector<256x128xbf16>, vector<128x128xbf16>, vector<256x128xf32> -> vector<256x128xf32>
    %c0_7 = arith.constant 0 : index
    %c0_8 = arith.constant 0 : index
    %7 = vector.load %arg7[%c0_7, %c0_8] : memref<1x128xf32, #tpu.memory_space<vmem>>, vector<1x128xf32>
    %8 = vector.broadcast %7 : vector<1x128xf32> to vector<256x128xf32>
    %9 = arith.addf %6, %8 : vector<256x128xf32>
    %10 = arith.truncf %9 : vector<256x128xf32> to vector<256x128xbf16>
    %cst_9 = arith.constant dense<0.000000e+00> : vector<256x256xf32>
    %11 = tpu.matmul %10, %4, %cst_9 {dimension_numbers = #tpu.dot_dimension_numbers<[1], [1], [0], [0], [0, 0, 1, 0], [], []>} : vector<256x128xbf16>, vector<256x128xbf16>, vector<256x256xf32> -> vector<256x256xf32>
    %cst_10 = arith.constant dense<0xFF800000> : vector<256xf32>
    %12 = vector.multi_reduction <maximumf>, %11, %cst_10 [1] : vector<256x256xf32> to vector<256xf32>
    %13 = vector.shape_cast %12 : vector<256xf32> to vector<256x1xf32>
    %14 = vector.broadcast %13 : vector<256x1xf32> to vector<256x256xf32>
    %15 = arith.subf %11, %14 : vector<256x256xf32>
    %16 = math.exp %15 : vector<256x256xf32>
    %cst_11 = arith.constant dense<0.000000e+00> : vector<256xf32>
    %17 = vector.multi_reduction <add>, %16, %cst_11 [1] : vector<256x256xf32> to vector<256xf32>
    %18 = vector.shape_cast %17 : vector<256xf32> to vector<256x1xf32>
    %19 = tpu.reciprocal %18 {approx = true} : vector<256x1xf32> -> vector<256x1xf32>
    %20 = vector.broadcast %19 : vector<256x1xf32> to vector<256x256xf32>
    %21 = arith.mulf %16, %20 : vector<256x256xf32>
    %22 = arith.truncf %21 : vector<256x256xf32> to vector<256x256xbf16>
    %c0_12 = arith.constant 0 : index
    %c0_13 = arith.constant 0 : index
    %c0_14 = arith.constant 0 : index
    %23 = vector.load %arg9[%c0_12, %c0_13, %c0_14] : memref<1x256x256xf32, #tpu.memory_space<vmem>>, vector<1x256x256xf32>
    %24 = vector.shape_cast %23 : vector<1x256x256xf32> to vector<256x256xf32>
    %25 = vector.shape_cast %21 : vector<256x256xf32> to vector<1x256x256xf32>
    tpu.vector_store %arg9[%c0_12, %c0_13, %c0_14], %25 {strides = array<i32>} : memref<1x256x256xf32, #tpu.memory_space<vmem>>, vector<1x256x256xf32>,
    %c0_15 = arith.constant 0 : index
    %c0_16 = arith.constant 0 : index
    %c0_17 = arith.constant 0 : index
    %26 = vector.load %arg5[%c0_15, %c0_16, %c0_17] : memref<1x256x128xbf16, #tpu.memory_space<vmem>>, vector<1x256x128xbf16>
    %27 = vector.shape_cast %26 : vector<1x256x128xbf16> to vector<256x128xbf16>
    %cst_18 = arith.constant dense<0.000000e+00> : vector<256x128xf32>
    %28 = tpu.matmul %22, %27, %cst_18 {dimension_numbers = #tpu.dot_dimension_numbers<[1], [0], [0], [1], [0, 0, 1, 1], [], []>} : vector<256x256xbf16>, vector<256x128xbf16>, vector<256x128xf32> -> vector<256x128xf32>
    %c0_19 = arith.constant 0 : index
    %29 = memref.load %arg2[%c0_19] : memref<1xf32, #tpu.memory_space<smem>>
    %30 = vector.broadcast %29 : f32 to vector<256x128xf32>
    %31 = arith.mulf %30, %28 : vector<256x128xf32>
    %32 = arith.addf %31, %1 : vector<256x128xf32>
    %c0_20 = arith.constant 0 : index
    %c0_21 = arith.constant 0 : index
    %c0_22 = arith.constant 0 : index
    %33 = vector.load %arg8[%c0_20, %c0_21, %c0_22] : memref<1x256x128xf32, #tpu.memory_space<vmem>>, vector<1x256x128xf32>
    %34 = vector.shape_cast %33 : vector<1x256x128xf32> to vector<256x128xf32>
    %35 = vector.shape_cast %32 : vector<256x128xf32> to vector<1x256x128xf32>
    tpu.vector_store %arg8[%c0_20, %c0_21, %c0_22], %35 {strides = array<i32>} : memref<1x256x128xf32, #tpu.memory_space<vmem>>, vector<1x256x128xf32>,
    return
  }
  func.func @transform_0(%arg0: i32, %arg1: i32) -> i32 {
    %c0_i32 = arith.constant 0 : i32
    %c0_i32_0 = arith.constant 0 : i32
    return %c0_i32 : i32
  }
  func.func @transform_1(%arg0: i32, %arg1: i32) -> (i32, i32, i32) {
    %c0_i32 = arith.constant 0 : i32
    %c0_i32_0 = arith.constant 0 : i32
    return %arg0, %arg1, %c0_i32 : i32, i32, i32
  }
  func.func @transform_2(%arg0: i32, %arg1: i32) -> (i32, i32, i32) {
    %c0_i32 = arith.constant 0 : i32
    %c0_i32_0 = arith.constant 0 : i32
    %c0_i32_1 = arith.constant 0 : i32
    return %arg0, %c0_i32, %c0_i32_0 : i32, i32, i32
  }
  func.func @transform_3(%arg0: i32, %arg1: i32) -> (i32, i32, i32) {
    %c0_i32 = arith.constant 0 : i32
    %c0_i32_0 = arith.constant 0 : i32
    %c0_i32_1 = arith.constant 0 : i32
    return %arg0, %c0_i32, %c0_i32_0 : i32, i32, i32
  }
  func.func @transform_4(%arg0: i32, %arg1: i32) -> (i32, i32) {
    %c0_i32 = arith.constant 0 : i32
    %c0_i32_0 = arith.constant 0 : i32
    %c0_i32_1 = arith.constant 0 : i32
    return %c0_i32, %c0_i32_0 : i32, i32
  }
  func.func @transform_5(%arg0: i32, %arg1: i32) -> (i32, i32) {
    %c0_i32 = arith.constant 0 : i32
    %c0_i32_0 = arith.constant 0 : i32
    %c0_i32_1 = arith.constant 0 : i32
    return %c0_i32, %c0_i32_0 : i32, i32
  }
  func.func @transform_6(%arg0: i32, %arg1: i32) -> (i32, i32, i32) {
    %c0_i32 = arith.constant 0 : i32
    %c0_i32_0 = arith.constant 0 : i32
    return %arg0, %arg1, %c0_i32 : i32, i32, i32
  }
  func.func @transform_7(%arg0: i32, %arg1: i32) -> (i32, i32, i32) {
    %c0_i32 = arith.constant 0 : i32
    %c0_i32_0 = arith.constant 0 : i32
    return %arg0, %arg1, %c0_i32 : i32, i32, i32
  }
}

</mosaic_0001>

<llo_original>
// kernel: self_attn_pallas.1
$region0: #{self_attn_pallas.1}
  #allocation0 [shape = 'u32[]', space=smem, size = 0x4, offset = 0x4, fixed_abs, tag = 'smem constant byte address 0x4 - core index']
  #allocation1 [shape = 'u32[144,128]{1,0:T(1,128)}', space=vmem, size = 0x12000, scoped, tag = 'internal scratch']
  #allocation2 [shape = 'f32[1]{0:T(128)S(6)}', space=smem, size = 0x200, scoped, tag = 'scoped memory for self_attn_pallas.1']
  %s0 = inlined_call_operand.<no memory space> [shape: f32[1], index: 0, kind: input, shape index: {}]
  %s1 = inlined_call_operand.vmem [shape: f32[2,256,128], index: 1, kind: input, shape index: {}]
  %s2 = inlined_call_operand.vmem [shape: bf16[2,256,128], index: 2, kind: input, shape index: {}]
  %s3 = inlined_call_operand.vmem [shape: bf16[2,256,128], index: 3, kind: input, shape index: {}]
  %s4 = inlined_call_operand.vmem [shape: bf16[128,128], index: 4, kind: input, shape index: {}]
  %s5 = inlined_call_operand.vmem [shape: f32[1,128], index: 5, kind: input, shape index: {}]
  %s6 = inlined_call_operand.vmem [shape: f32[2,256,128], index: 6, kind: output, shape index: {0}]
  %s7 = inlined_call_operand.hbm [shape: f32[2,256,256], index: 7, kind: output, shape index: {1}]
  %8 = xla_tuple %s6, %s7
  %s9 = sld [smem:[#allocation0]]
  $region65: #{self_attn_pallas.1} parent=0
    _
  %s11 = ssub.s32 1, %s9
  %s12 = scalar_select 0, %s11, %s9
  %13 = sst [smem:[#allocation2]] %s0
  $region1: #{self_attn_pallas.1} parent=0
    #allocation3 [shape = 'u8[524288]{0}', space=vmem, size = 0x80000, scoped, tag = 'output window, operand 1']
    #allocation4 [shape = 's32[2]{0}', space=sflag, size = 0x8, scoped, tag = 'scoped memory for self_attn_pallas.1']
    %14 = vsyncpa [#allocation4], 0
    %s15 = scalar_lea.sflag [#allocation4], 1
    %16 = vsyncpa %s15, 0
    loop: start=0, step=1, limit=4
    $region2: #{self_attn_pallas.1} parent=1 // loop_pre_header
      _
    $region3: #{self_attn_pallas.1} parent=1 // loop_header
      %s18 = sphi 0, %s22
      %p19 = scmp.ge.s32.totalorder %s18, 4
      %s25 = sphi 0, %s37
      %s26 = sphi 0, %s33
      %s27 = sphi 0, %s25
      %s28 = sphi 0, %s26
      %s29 = sphi 0, %s27
      %s30 = sphi 0, %s28
      %s38 = sphi 0, %s38
      %s40 = sphi 0, %s38
      %s41 = sphi 0, %s40
      %s55 = sphi 0, %s41
      %s63 = sphi 0, %s65
      %s66 = sphi 0, %s63
      %s67 = sphi 0, %s66
      %s83 = sphi 0, %s67
      %s89 = sphi 0, %s91
      %s92 = sphi 0, %s89
      %s93 = sphi 0, %s92
      %s109 = sphi 0, %s93
      %s115 = sphi 0, %s117
      %s118 = sphi 0, %s115
      %s119 = sphi 0, %s118
      %s135 = sphi 0, %s119
      %s139 = sphi 0, %s139
      %s141 = sphi 0, %s139
      %s142 = sphi 0, %s141
      %s156 = sphi 0, %s142
      %s160 = sphi 0, %s160
      %s162 = sphi 0, %s160
      %s163 = sphi 0, %s162
      %s177 = sphi 0, %s163
      %s185 = sphi 0, %s187
      %s188 = sphi 0, %s185
      %s189 = sphi 0, %s188
      %s205 = sphi 0, %s189
      %s213 = sphi 0, %s215
      %s216 = sphi 0, %s213
      %s217 = sphi 0, %s216
      %s233 = sphi 0, %s217
    $region4: #{self_attn_pallas.1} parent=1 // loop_header_branch
      %21 = sbr.rel (%p19) target = $region8
    $region5: #{self_attn_pallas.1} parent=1 // loop_body
      %s23 = ssub.s32 %s18, 1
      %s24 = ssub.s32 %s18, 2
      %s31 = sadd.s32 1, %s26
      %p32 = scmp.ge.s32.totalorder %s31, 1
      %s33 = scalar_select %p32, 0, %s31
      %s34 = sadd.s32 1, %s25
      %s35 = scalar_select %p32, %s34, %s25
      %p36 = scmp.ge.s32.totalorder %s35, 2
      %s37 = scalar_select %p36, 0, %s35
      %s39 = sadd.s32 %s38, 1
      %p42 = scmp.eq.s32.totalorder %s18, 1
      %p43 = scmp.ne.s32.totalorder %s38, %s40
      %p44 = scmp.eq.s32.totalorder %s18, 0
      %p45 = por %p43, %p44
      %p46 = scmp.ne.s32.totalorder %s38, %s40
      %p47 = scmp.eq.s32.totalorder %s23, 1
      %p48 = por %p46, %p47
      %p49 = scmp.ne.s32.totalorder %s40, %s41
      %p50 = scmp.eq.s32.totalorder %s23, 0
      %p51 = por %p49, %p50
      %p52 = scmp.ne.s32.totalorder %s40, %s41
      %p53 = scmp.eq.s32.totalorder %s24, 1
      %p54 = por %p52, %p53
      %p56 = scmp.ne.s32.totalorder %s41, %s55
      %p57 = scmp.eq.s32.totalorder %s24, 0
      %p58 = por %p56, %p57
      %s59 = ssub.s32 %s25, %s37
      %s60 = ssub.s32 %s26, %s33
      %s61 = sor.u32 %s59, %s60
      %p62 = scmp.eq.s32.totalorder %s61, 0
      %s64 = sadd.s32 %s63, 1
      %s65 = scalar_select %p62, %s63, %s64
      %p68 = pneg %p62
      %p69 = scmp.eq.s32.totalorder %s18, 1
      %p70 = por %p68, %p69
      %p71 = scmp.ne.s32.totalorder %s63, %s66
      %p72 = scmp.eq.s32.totalorder %s18, 0
      %p73 = por %p71, %p72
      %p74 = scmp.ne.s32.totalorder %s63, %s66
      %p75 = scmp.eq.s32.totalorder %s23, 1
      %p76 = por %p74, %p75
      %p77 = scmp.ne.s32.totalorder %s66, %s67
      %p78 = scmp.eq.s32.totalorder %s23, 0
      %p79 = por %p77, %p78
      %p80 = scmp.ne.s32.totalorder %s66, %s67
      %p81 = scmp.eq.s32.totalorder %s24, 1
      %p82 = por %p80, %p81
      %p84 = scmp.ne.s32.totalorder %s67, %s83
      %p85 = scmp.eq.s32.totalorder %s24, 0
      %p86 = por %p84, %p85
      %s87 = ssub.s32 %s25, %s37
      %p88 = scmp.eq.s32.totalorder %s87, 0
      %s90 = sadd.s32 %s89, 1
      %s91 = scalar_select %p88, %s89, %s90
      %p94 = pneg %p88
      %p95 = scmp.eq.s32.totalorder %s18, 1
      %p96 = por %p94, %p95
      %p97 = scmp.ne.s32.totalorder %s89, %s92
      %p98 = scmp.eq.s32.totalorder %s18, 0
      %p99 = por %p97, %p98
      %p100 = scmp.ne.s32.totalorder %s89, %s92
      %p101 = scmp.eq.s32.totalorder %s23, 1
      %p102 = por %p100, %p101
      %p103 = scmp.ne.s32.totalorder %s92, %s93
      %p104 = scmp.eq.s32.totalorder %s23, 0
      %p105 = por %p103, %p104
      %p106 = scmp.ne.s32.totalorder %s92, %s93
      %p107 = scmp.eq.s32.totalorder %s24, 1
      %p108 = por %p106, %p107
      %p110 = scmp.ne.s32.totalorder %s93, %s109
      %p111 = scmp.eq.s32.totalorder %s24, 0
      %p112 = por %p110, %p111
      %s113 = ssub.s32 %s25, %s37
      %p114 = scmp.eq.s32.totalorder %s113, 0
      %s116 = sadd.s32 %s115, 1
      %s117 = scalar_select %p114, %s115, %s116
      %p120 = pneg %p114
      %p121 = scmp.eq.s32.totalorder %s18, 1
      %p122 = por %p120, %p121
      %p123 = scmp.ne.s32.totalorder %s115, %s118
      %p124 = scmp.eq.s32.totalorder %s18, 0
      %p125 = por %p123, %p124
      %p126 = scmp.ne.s32.totalorder %s115, %s118
      %p127 = scmp.eq.s32.totalorder %s23, 1
      %p128 = por %p126, %p127
      %p129 = scmp.ne.s32.totalorder %s118, %s119
      %p130 = scmp.eq.s32.totalorder %s23, 0
      %p131 = por %p129, %p130
      %p132 = scmp.ne.s32.totalorder %s118, %s119
      %p133 = scmp.eq.s32.totalorder %s24, 1
      %p134 = por %p132, %p133
      %p136 = scmp.ne.s32.totalorder %s119, %s135
      %p137 = scmp.eq.s32.totalorder %s24, 0
      %p138 = por %p136, %p137
      %s140 = sadd.s32 %s139, 1
      %p143 = scmp.eq.s32.totalorder %s18, 1
      %p144 = scmp.ne.s32.totalorder %s139, %s141
      %p145 = scmp.eq.s32.totalorder %s18, 0
      %p146 = por %p144, %p145
      %p147 = scmp.ne.s32.totalorder %s139, %s141
      %p148 = scmp.eq.s32.totalorder %s23, 1
      %p149 = por %p147, %p148
      %p150 = scmp.ne.s32.totalorder %s141, %s142
      %p151 = scmp.eq.s32.totalorder %s23, 0
      %p152 = por %p150, %p151
      %p153 = scmp.ne.s32.totalorder %s141, %s142
      %p154 = scmp.eq.s32.totalorder %s24, 1
      %p155 = por %p153, %p154
      %p157 = scmp.ne.s32.totalorder %s142, %s156
      %p158 = scmp.eq.s32.totalorder %s24, 0
      %p159 = por %p157, %p158
      %s161 = sadd.s32 %s160, 1
      %p164 = scmp.eq.s32.totalorder %s18, 1
      %p165 = scmp.ne.s32.totalorder %s160, %s162
      %p166 = scmp.eq.s32.totalorder %s18, 0
      %p167 = por %p165, %p166
      %p168 = scmp.ne.s32.totalorder %s160, %s162
      %p169 = scmp.eq.s32.totalorder %s23, 1
      %p170 = por %p168, %p169
      %p171 = scmp.ne.s32.totalorder %s162, %s163
      %p172 = scmp.eq.s32.totalorder %s23, 0
      %p173 = por %p171, %p172
      %p174 = scmp.ne.s32.totalorder %s162, %s163
      %p175 = scmp.eq.s32.totalorder %s24, 1
      %p176 = por %p174, %p175
      %p178 = scmp.ne.s32.totalorder %s163, %s177
      %p179 = scmp.eq.s32.totalorder %s24, 0
      %p180 = por %p178, %p179
      %s181 = ssub.s32 %s25, %s37
      %s182 = ssub.s32 %s26, %s33
      %s183 = sor.u32 %s181, %s182
      %p184 = scmp.eq.s32.totalorder %s183, 0
      %s186 = sadd.s32 %s185, 1
      %s187 = scalar_select %p184, %s185, %s186
      %p190 = pneg %p184
      %p191 = scmp.eq.s32.totalorder %s18, 1
      %p192 = por %p190, %p191
      %p193 = scmp.ne.s32.totalorder %s185, %s188
      %p194 = scmp.eq.s32.totalorder %s18, 0
      %p195 = por %p193, %p194
      %p196 = scmp.ne.s32.totalorder %s185, %s188
      %p197 = scmp.eq.s32.totalorder %s23, 1
      %p198 = por %p196, %p197
      %p199 = scmp.ne.s32.totalorder %s188, %s189
      %p200 = scmp.eq.s32.totalorder %s23, 0
      %p201 = por %p199, %p200
      %p202 = scmp.ne.s32.totalorder %s188, %s189
      %p203 = scmp.eq.s32.totalorder %s24, 1
      %p204 = por %p202, %p203
      %p206 = scmp.ne.s32.totalorder %s189, %s205
      %p207 = scmp.eq.s32.totalorder %s24, 0
      %p208 = por %p206, %p207
      %s209 = ssub.s32 %s25, %s37
      %s210 = ssub.s32 %s26, %s33
      %s211 = sor.u32 %s209, %s210
      %p212 = scmp.eq.s32.totalorder %s211, 0
      %s214 = sadd.s32 %s213, 1
      %s215 = scalar_select %p212, %s213, %s214
      %p218 = pneg %p212
      %p219 = scmp.eq.s32.totalorder %s18, 1
      %p220 = por %p218, %p219
      %p221 = scmp.ne.s32.totalorder %s213, %s216
      %p222 = scmp.eq.s32.totalorder %s18, 0
      %p223 = por %p221, %p222
      %p224 = scmp.ne.s32.totalorder %s213, %s216
      %p225 = scmp.eq.s32.totalorder %s23, 1
      %p226 = por %p224, %p225
      %p227 = scmp.ne.s32.totalorder %s216, %s217
      %p228 = scmp.eq.s32.totalorder %s23, 0
      %p229 = por %p227, %p228
      %p230 = scmp.ne.s32.totalorder %s216, %s217
      %p231 = scmp.eq.s32.totalorder %s24, 1
      %p232 = por %p230, %p231
      %p234 = scmp.ne.s32.totalorder %s217, %s233
      %p235 = scmp.eq.s32.totalorder %s24, 0
      %p236 = por %p234, %p235
      %p237 = scmp.le.s32.totalorder 1, %s18
      %p238 = scmp.lt.s32.totalorder %s18, 3
      %p239 = pnand %p237, %p238
      %p240 = pneg %p239
      // Predicated region
      $region9: #{self_attn_pallas.1} parent=5 // pred_check
        _
      $region10: #{self_attn_pallas.1} parent=5 // pred_check_branch
        %242 = sbr.rel (%p239) target = $region12
      $region11: #{self_attn_pallas.1} parent=5 // pred_region
        %s243 = ssub.s32 %s18, 1
        // Predicated region
        $region13: #{self_attn_pallas.1} parent=11 // pred_check
          %p244 = pneg %p51
        $region14: #{self_attn_pallas.1} parent=11 // pred_check_branch
          %246 = sbr.rel (%p244) target = $region16
        $region15: #{self_attn_pallas.1} parent=11 // pred_region
          _
        $region16: #{self_attn_pallas.1} parent=11 // pred_fallthru
          _
        // Predicated region
        $region17: #{self_attn_pallas.1} parent=11 // pred_check
          %p247 = pneg %p152
        $region18: #{self_attn_pallas.1} parent=11 // pred_check_branch
          %249 = sbr.rel (%p247) target = $region20
        $region19: #{self_attn_pallas.1} parent=11 // pred_region
          _
        $region20: #{self_attn_pallas.1} parent=11 // pred_fallthru
          _
        // Predicated region
        $region21: #{self_attn_pallas.1} parent=11 // pred_check
          %p250 = pneg %p173
        $region22: #{self_attn_pallas.1} parent=11 // pred_check_branch
          %252 = sbr.rel (%p250) target = $region24
        $region23: #{self_attn_pallas.1} parent=11 // pred_region
          _
        $region24: #{self_attn_pallas.1} parent=11 // pred_fallthru
          _
      $region12: #{self_attn_pallas.1} parent=5 // pred_fallthru
        _
      %p253 = scmp.lt.s32.totalorder %s18, 2
      // Predicated region
      $region25: #{self_attn_pallas.1} parent=5 // pred_check
        %p254 = pneg %p253
      $region26: #{self_attn_pallas.1} parent=5 // pred_check_branch
        %256 = sbr.rel (%p254) target = $region28
      $region27: #{self_attn_pallas.1} parent=5 // pred_region
        // Predicated region
        $region29: #{self_attn_pallas.1} parent=27 // pred_check
          %p257 = pneg %p73
        $region30: #{self_attn_pallas.1} parent=27 // pred_check_branch
          %259 = sbr.rel (%p257) target = $region32
        $region31: #{self_attn_pallas.1} parent=27 // pred_region
          %s260 = smul.u32 32, %s26
          %p261 = scmp.lt.s32.totalorder %s25, 1
          %s262 = scalar_select %p261, %s25, 1
          %p263 = scmp.lt.s32.totalorder %s260, 31
          %s264 = scalar_select %p263, %s260, 31
          %s265 = smul.addr %s262, 32
          %s266 = sadd.s32 %s264, %s265
          %s267 = smul.addr %s266, 8
          %s268 = scalar_lea.vmem %s1, %s267
          %s269 = smul.u32 32, %s26
        $region32: #{self_attn_pallas.1} parent=27 // pred_fallthru
          _
        // Predicated region
        $region33: #{self_attn_pallas.1} parent=27 // pred_check
          %p270 = pneg %p99
        $region34: #{self_attn_pallas.1} parent=27 // pred_check_branch
          %272 = sbr.rel (%p270) target = $region36
        $region35: #{self_attn_pallas.1} parent=27 // pred_region
          %p273 = scmp.lt.s32.totalorder %s25, 1
          %s274 = scalar_select %p273, %s25, 1
          %s275 = smul.addr %s274, 32
          %s276 = smul.addr %s275, 4
          %s277 = scalar_lea.vmem %s2, %s276
        $region36: #{self_attn_pallas.1} parent=27 // pred_fallthru
          _
        // Predicated region
        $region37: #{self_attn_pallas.1} parent=27 // pred_check
          %p278 = pneg %p125
        $region38: #{self_attn_pallas.1} parent=27 // pred_check_branch
          %280 = sbr.rel (%p278) target = $region40
        $region39: #{self_attn_pallas.1} parent=27 // pred_region
          %p281 = scmp.lt.s32.totalorder %s25, 1
          %s282 = scalar_select %p281, %s25, 1
          %s283 = smul.addr %s282, 32
          %s284 = smul.addr %s283, 4
          %s285 = scalar_lea.vmem %s3, %s284
        $region40: #{self_attn_pallas.1} parent=27 // pred_fallthru
          _
      $region28: #{self_attn_pallas.1} parent=5 // pred_fallthru
        _
      %p286 = scmp.le.s32.totalorder 1, %s18
      %p287 = scmp.lt.s32.totalorder %s18, 3
      %p288 = pnand %p286, %p287
      %p289 = pneg %p288
      // Predicated region
      $region41: #{self_attn_pallas.1} parent=5 // pred_check
        _
      $region42: #{self_attn_pallas.1} parent=5 // pred_check_branch
        %291 = sbr.rel (%p288) target = $region44
      $region43: #{self_attn_pallas.1} parent=5 // pred_region
        %s292 = ssub.s32 %s18, 1
        %p293 = pneg %p51
        %p294 = pneg %p48
        %s295 = smul.u32 32, %s28
        %p296 = scmp.lt.s32.totalorder %s27, 1
        %s297 = scalar_select %p296, %s27, 1
        %p298 = scmp.lt.s32.totalorder %s295, 31
        %s299 = scalar_select %p298, %s295, 31
        %s300 = smul.addr %s297, 32
        %s301 = sadd.s32 %s299, %s300
        %s302 = smul.addr %s301, 8
        %s303 = scalar_lea.vmem %s1, %s302
        %p304 = pneg %p79
        %p305 = pneg %p76
        %p306 = scmp.lt.s32.totalorder %s27, 1
        %s307 = scalar_select %p306, %s27, 1
        %s308 = smul.addr %s307, 32
        %s309 = smul.addr %s308, 4
        %s310 = scalar_lea.vmem %s2, %s309
        %p311 = pneg %p105
        %p312 = pneg %p102
        %p313 = scmp.lt.s32.totalorder %s27, 1
        %s314 = scalar_select %p313, %s27, 1
        %s315 = smul.addr %s314, 32
        %s316 = smul.addr %s315, 4
        %s317 = scalar_lea.vmem %s3, %s316
        %p318 = pneg %p131
        %p319 = pneg %p128
        %p320 = pneg %p152
        %p321 = pneg %p149
        %p322 = pneg %p173
        %p323 = pneg %p170
        %p324 = pneg %p201
        %p325 = pneg %p198
        %s326 = smul.u32 32, %s28
        %p327 = scmp.lt.s32.totalorder %s27, 1
        %s328 = scalar_select %p327, %s27, 1
        %p329 = scmp.lt.s32.totalorder %s326, 31
        %s330 = scalar_select %p329, %s326, 31
        %s331 = smul.addr %s328, 32
        %s332 = sadd.s32 %s330, %s331
        %s333 = smul.addr %s332, 8
        %s334 = scalar_lea.vmem %s6, %s333
        %p335 = pneg %p229
        %p336 = pneg %p226
        %s337 = sand.u32 %s216, 1
        %s338 = scalar_lea.sflag [#allocation4], %s337
        %s339 = sand.u32 %s216, 1
        %s340 = smul.addr %s339, 512
        %s341 = scalar_lea.vmem [#allocation3], %s340
        %s342 = smul.u32 32, %s28
        %p343 = scmp.lt.s32.totalorder %s27, 1
        %s344 = scalar_select %p343, %s27, 1
        %p345 = scmp.lt.s32.totalorder %s342, 31
        %s346 = scalar_select %p345, %s342, 31
        %s347 = smul.addr %s344, 32
        %s348 = sadd.s32 %s346, %s347
        %s349 = smul.addr %s348, 8
        %s350 = scalar_lea.vmem %s1, %s349
        %s351 = smul.u32 32, %s28
        %p352 = scmp.lt.s32.totalorder %s27, 1
        %s353 = scalar_select %p352, %s27, 1
        %s354 = smul.addr %s353, 32
        %s355 = smul.addr %s354, 4
        %s356 = scalar_lea.vmem %s2, %s355
        %p357 = scmp.lt.s32.totalorder %s27, 1
        %s358 = scalar_select %p357, %s27, 1
        %s359 = smul.addr %s358, 32
        %s360 = smul.addr %s359, 4
        %s361 = scalar_lea.vmem %s3, %s360
        %s362 = smul.u32 32, %s28
        %p363 = scmp.lt.s32.totalorder %s27, 1
        %s364 = scalar_select %p363, %s27, 1
        %p365 = scmp.lt.s32.totalorder %s362, 31
        %s366 = scalar_select %p365, %s362, 31
        %s367 = smul.addr %s364, 32
        %s368 = sadd.s32 %s366, %s367
        %s369 = smul.addr %s368, 8
        %s370 = scalar_lea.vmem %s6, %s369
        %s371 = smul.u32 32, %s28
        %s372 = smul.u32 32, %s28
        %v374 = vld [vmem:[%s350] sm:$0xff]
        %v375 = vld [vmem:[%s350 + $0x8] sm:$0xff]
        %v376 = vld [vmem:[%s350 + $0x10] sm:$0xff]
        %v377 = vld [vmem:[%s350 + $0x18] sm:$0xff]
        %v378 = vld [vmem:[%s350 + $0x20] sm:$0xff]
        %v379 = vld [vmem:[%s350 + $0x28] sm:$0xff]
        %v380 = vld [vmem:[%s350 + $0x30] sm:$0xff]
        %v381 = vld [vmem:[%s350 + $0x38] sm:$0xff]
        %v382 = vld [vmem:[%s350 + $0x40] sm:$0xff]
        %v383 = vld [vmem:[%s350 + $0x48] sm:$0xff]
        %v384 = vld [vmem:[%s350 + $0x50] sm:$0xff]
        %v385 = vld [vmem:[%s350 + $0x58] sm:$0xff]
        %v386 = vld [vmem:[%s350 + $0x60] sm:$0xff]
        %v387 = vld [vmem:[%s350 + $0x68] sm:$0xff]
        %v388 = vld [vmem:[%s350 + $0x70] sm:$0xff]
        %v389 = vld [vmem:[%s350 + $0x78] sm:$0xff]
        %v390 = vld [vmem:[%s350 + $0x80] sm:$0xff]
        %v391 = vld [vmem:[%s350 + $0x88] sm:$0xff]
        %v392 = vld [vmem:[%s350 + $0x90] sm:$0xff]
        %v393 = vld [vmem:[%s350 + $0x98] sm:$0xff]
        %v394 = vld [vmem:[%s350 + $0xa0] sm:$0xff]
        %v395 = vld [vmem:[%s350 + $0xa8] sm:$0xff]
        %v396 = vld [vmem:[%s350 + $0xb0] sm:$0xff]
        %v397 = vld [vmem:[%s350 + $0xb8] sm:$0xff]
        %v398 = vld [vmem:[%s350 + $0xc0] sm:$0xff]
        %v399 = vld [vmem:[%s350 + $0xc8] sm:$0xff]
        %v400 = vld [vmem:[%s350 + $0xd0] sm:$0xff]
        %v401 = vld [vmem:[%s350 + $0xd8] sm:$0xff]
        %v402 = vld [vmem:[%s350 + $0xe0] sm:$0xff]
        %v403 = vld [vmem:[%s350 + $0xe8] sm:$0xff]
        %v404 = vld [vmem:[%s350 + $0xf0] sm:$0xff]
        %v405 = vld [vmem:[%s350 + $0xf8] sm:$0xff]
        %v406 = vpack.c.bf16 %v375, %v374
        %v407 = vpack.c.bf16 %v377, %v376
        %v408 = vpack.c.bf16 %v379, %v378
        %v409 = vpack.c.bf16 %v381, %v380
        %v410 = vpack.c.bf16 %v383, %v382
        %v411 = vpack.c.bf16 %v385, %v384
        %v412 = vpack.c.bf16 %v387, %v386
        %v413 = vpack.c.bf16 %v389, %v388
        %v414 = vpack.c.bf16 %v391, %v390
        %v415 = vpack.c.bf16 %v393, %v392
        %v416 = vpack.c.bf16 %v395, %v394
        %v417 = vpack.c.bf16 %v397, %v396
        %v418 = vpack.c.bf16 %v399, %v398
        %v419 = vpack.c.bf16 %v401, %v400
        %v420 = vpack.c.bf16 %v403, %v402
        %v421 = vpack.c.bf16 %v405, %v404
        %v422 = vld [vmem:[%s356] sm:$0xf]
        %v423 = vld [vmem:[%s356 + $0x4] sm:$0xf]
        %v424 = vld [vmem:[%s356 + $0x8] sm:$0xf]
        %v425 = vld [vmem:[%s356 + $0xc] sm:$0xf]
        %v426 = vld [vmem:[%s356 + $0x10] sm:$0xf]
        %v427 = vld [vmem:[%s356 + $0x14] sm:$0xf]
        %v428 = vld [vmem:[%s356 + $0x18] sm:$0xf]
        %v429 = vld [vmem:[%s356 + $0x1c] sm:$0xf]
        %v430 = vld [vmem:[%s356 + $0x20] sm:$0xf]
        %v431 = vld [vmem:[%s356 + $0x24] sm:$0xf]
        %v432 = vld [vmem:[%s356 + $0x28] sm:$0xf]
        %v433 = vld [vmem:[%s356 + $0x2c] sm:$0xf]
        %v434 = vld [vmem:[%s356 + $0x30] sm:$0xf]
        %v435 = vld [vmem:[%s356 + $0x34] sm:$0xf]
        %v436 = vld [vmem:[%s356 + $0x38] sm:$0xf]
        %v437 = vld [vmem:[%s356 + $0x3c] sm:$0xf]
        %v438 = vld [vmem:[%s356 + $0x40] sm:$0xf]
        %v439 = vld [vmem:[%s356 + $0x44] sm:$0xf]
        %v440 = vld [vmem:[%s356 + $0x48] sm:$0xf]
        %v441 = vld [vmem:[%s356 + $0x4c] sm:$0xf]
        %v442 = vld [vmem:[%s356 + $0x50] sm:$0xf]
        %v443 = vld [vmem:[%s356 + $0x54] sm:$0xf]
        %v444 = vld [vmem:[%s356 + $0x58] sm:$0xf]
        %v445 = vld [vmem:[%s356 + $0x5c] sm:$0xf]
        %v446 = vld [vmem:[%s356 + $0x60] sm:$0xf]
        %v447 = vld [vmem:[%s356 + $0x64] sm:$0xf]
        %v448 = vld [vmem:[%s356 + $0x68] sm:$0xf]
        %v449 = vld [vmem:[%s356 + $0x6c] sm:$0xf]
        %v450 = vld [vmem:[%s356 + $0x70] sm:$0xf]
        %v451 = vld [vmem:[%s356 + $0x74] sm:$0xf]
        %v452 = vld [vmem:[%s356 + $0x78] sm:$0xf]
        %v453 = vld [vmem:[%s356 + $0x7c] sm:$0xf]
        %v454 = vld [vmem:[%s4] sm:$0xf]
        %v455 = vld [vmem:[%s4 + $0x4] sm:$0xf]
        %v456 = vld [vmem:[%s4 + $0x8] sm:$0xf]
        %v457 = vld [vmem:[%s4 + $0xc] sm:$0xf]
        %v458 = vld [vmem:[%s4 + $0x10] sm:$0xf]
        %v459 = vld [vmem:[%s4 + $0x14] sm:$0xf]
        %v460 = vld [vmem:[%s4 + $0x18] sm:$0xf]
        %v461 = vld [vmem:[%s4 + $0x1c] sm:$0xf]
        %v462 = vld [vmem:[%s4 + $0x20] sm:$0xf]
        %v463 = vld [vmem:[%s4 + $0x24] sm:$0xf]
        %v464 = vld [vmem:[%s4 + $0x28] sm:$0xf]
        %v465 = vld [vmem:[%s4 + $0x2c] sm:$0xf]
        %v466 = vld [vmem:[%s4 + $0x30] sm:$0xf]
        %v467 = vld [vmem:[%s4 + $0x34] sm:$0xf]
        %v468 = vld [vmem:[%s4 + $0x38] sm:$0xf]
        %v469 = vld [vmem:[%s4 + $0x3c] sm:$0xf]
        %v470 = vld [vmem:[%s5] sm:$0x1]
        %v472 = vlaneseq
        %v473 = vshrl.u32 %v472, 7
        %v474 = vsub.s32 0, %v473
        %v475 = vrot.slane %v470, %v474
        %v493 = vunpack.c.l.b16 %v454
        %v494 = vunpack.c.l.b16 %v455
        %v495 = vunpack.c.l.b16 %v456
        %v496 = vunpack.c.l.b16 %v457
        %v497 = vunpack.c.l.b16 %v458
        %v498 = vunpack.c.l.b16 %v459
        %v499 = vunpack.c.l.b16 %v460
        %v500 = vunpack.c.l.b16 %v461
        %v501 = vunpack.c.l.b16 %v462
        %v502 = vunpack.c.l.b16 %v463
        %v503 = vunpack.c.l.b16 %v464
        %v504 = vunpack.c.l.b16 %v465
        %v505 = vunpack.c.l.b16 %v466
        %v506 = vunpack.c.l.b16 %v467
        %v507 = vunpack.c.l.b16 %v468
        %v508 = vunpack.c.l.b16 %v469
        %v509 = vpack.c.b16 %v494, %v493
        %v510 = vpack.c.b16 %v496, %v495
        %v511 = vpack.c.b16 %v498, %v497
        %v512 = vpack.c.b16 %v500, %v499
        %v513 = vpack.c.b16 %v502, %v501
        %v514 = vpack.c.b16 %v504, %v503
        %v515 = vpack.c.b16 %v506, %v505
        %v516 = vpack.c.b16 %v508, %v507
        %525 = vmatprep.subr.bf16.mxu0 0
        %526 = vmatpush1.bf16.msra.mxu0 %v509
        %527 = vmatprep.subr.bf16.mxu0 0
        %528 = vmatpush1.bf16.msra.mxu0 %v510
        %529 = vmatprep.subr.bf16.mxu0 0
        %530 = vmatpush1.bf16.msra.mxu0 %v511
        %531 = vmatprep.subr.bf16.mxu0 0
        %532 = vmatpush1.bf16.msra.mxu0 %v512
        %533 = vmatprep.subr.bf16.mxu0 0
        %534 = vmatpush1.bf16.msra.mxu0 %v513
        %535 = vmatprep.subr.bf16.mxu0 0
        %536 = vmatpush1.bf16.msra.mxu0 %v514
        %537 = vmatprep.subr.bf16.mxu0 0
        %538 = vmatpush1.bf16.msra.mxu0 %v515
        %539 = vmatprep.subr.bf16.mxu0 0
        %540 = vmatpush1.bf16.msra.mxu0 %v516
        %541 = vmatprep.subr.bf16.mxu0 0
        %542 = vmatpush1.bf16.msra.mxu0 0
        %543 = vmatprep.subr.bf16.mxu0 0
        %544 = vmatpush1.bf16.msra.mxu0 0
        %545 = vmatprep.subr.bf16.mxu0 0
        %546 = vmatpush1.bf16.msra.mxu0 0
        %547 = vmatprep.subr.bf16.mxu0 0
        %548 = vmatpush1.bf16.msra.mxu0 0
        %549 = vmatprep.subr.bf16.mxu0 0
        %550 = vmatpush1.bf16.msra.mxu0 0
        %551 = vmatprep.subr.bf16.mxu0 0
        %552 = vmatpush1.bf16.msra.mxu0 0
        %553 = vmatprep.subr.bf16.mxu0 0
        %554 = vmatpush1.bf16.msra.mxu0 0
        %555 = vmatprep.subr.bf16.mxu0 0
        %556 = vmatpush1.bf16.msra.mxu0 0
        %557 = vmatprep.mubr.bf16.mxu0 0
        %558 = vmatmul.mubr.bf16.gmra.mrb[0].mxu0 %v406
        %v559 = vpop.f32.mrb[0].mxu0
        %v560 = vadd.f32 %v475, %v559
        %v561 = vpop.f32.mrb[0].mxu0
        %v562 = vpop.f32.mrb[0].mxu0
        %v563 = vadd.f32 %v475, %v562
        %v564 = vpop.f32.mrb[0].mxu0
        %565 = vmatprep.mubr.bf16.mxu0 0
        %566 = vmatmul.mubr.bf16.gmra.mrb[0].mxu0 %v407
        %v567 = vpop.f32.mrb[0].mxu0
        %v568 = vadd.f32 %v475, %v567
        %v569 = vpop.f32.mrb[0].mxu0
        %v570 = vpop.f32.mrb[0].mxu0
        %v571 = vadd.f32 %v475, %v570
        %v572 = vpop.f32.mrb[0].mxu0
        %573 = vmatprep.mubr.bf16.mxu0 0
        %574 = vmatmul.mubr.bf16.gmra.mrb[0].mxu0 %v408
        %v575 = vpop.f32.mrb[0].mxu0
        %v576 = vadd.f32 %v475, %v575
        %v577 = vpop.f32.mrb[0].mxu0
        %v578 = vpop.f32.mrb[0].mxu0
        %v579 = vadd.f32 %v475, %v578
        %v580 = vpop.f32.mrb[0].mxu0
        %581 = vmatprep.mubr.bf16.mxu0 0
        %582 = vmatmul.mubr.bf16.gmra.mrb[0].mxu0 %v409
        %v583 = vpop.f32.mrb[0].mxu0
        %v584 = vadd.f32 %v475, %v583
        %v585 = vpop.f32.mrb[0].mxu0
        %v586 = vpop.f32.mrb[0].mxu0
        %v587 = vadd.f32 %v475, %v586
        %v588 = vpop.f32.mrb[0].mxu0
        %589 = vmatprep.mubr.bf16.mxu0 0
        %590 = vmatmul.mubr.bf16.gmra.mrb[0].mxu0 %v410
        %v591 = vpop.f32.mrb[0].mxu0
        %v592 = vadd.f32 %v475, %v591
        %v593 = vpop.f32.mrb[0].mxu0
        %v594 = vpop.f32.mrb[0].mxu0
        %v595 = vadd.f32 %v475, %v594
        %v596 = vpop.f32.mrb[0].mxu0
        %597 = vmatprep.mubr.bf16.mxu0 0
        %598 = vmatmul.mubr.bf16.gmra.mrb[0].mxu0 %v411
        %v599 = vpop.f32.mrb[0].mxu0
        %v600 = vadd.f32 %v475, %v599
        %v601 = vpop.f32.mrb[0].mxu0
        %v602 = vpop.f32.mrb[0].mxu0
        %v603 = vadd.f32 %v475, %v602
        %v604 = vpop.f32.mrb[0].mxu0
        %605 = vmatprep.mubr.bf16.mxu0 0
        %606 = vmatmul.mubr.bf16.gmra.mrb[0].mxu0 %v412
        %v607 = vpop.f32.mrb[0].mxu0
        %v608 = vadd.f32 %v475, %v607
        %v609 = vpop.f32.mrb[0].mxu0
        %v610 = vpop.f32.mrb[0].mxu0
        %v611 = vadd.f32 %v475, %v610
        %v612 = vpop.f32.mrb[0].mxu0
        %613 = vmatprep.mubr.bf16.mxu0 0
        %614 = vmatmul.mubr.bf16.gmra.mrb[0].mxu0 %v413
        %v615 = vpop.f32.mrb[0].mxu0
        %v616 = vadd.f32 %v475, %v615
        %v617 = vpop.f32.mrb[0].mxu0
        %v618 = vpop.f32.mrb[0].mxu0
        %v619 = vadd.f32 %v475, %v618
        %v620 = vpop.f32.mrb[0].mxu0
        %621 = vmatprep.mubr.bf16.mxu0 0
        %622 = vmatmul.mubr.bf16.gmra.mrb[0].mxu0 %v414
        %v623 = vpop.f32.mrb[0].mxu0
        %v624 = vadd.f32 %v475, %v623
        %v625 = vpop.f32.mrb[0].mxu0
        %v626 = vpop.f32.mrb[0].mxu0
        %v627 = vadd.f32 %v475, %v626
        %v628 = vpop.f32.mrb[0].mxu0
        %629 = vmatprep.mubr.bf16.mxu0 0
        %630 = vmatmul.mubr.bf16.gmra.mrb[0].mxu0 %v415
        %v631 = vpop.f32.mrb[0].mxu0
        %v632 = vadd.f32 %v475, %v631
        %v633 = vpop.f32.mrb[0].mxu0
        %v634 = vpop.f32.mrb[0].mxu0
        %v635 = vadd.f32 %v475, %v634
        %v636 = vpop.f32.mrb[0].mxu0
        %637 = vmatprep.mubr.bf16.mxu0 0
        %638 = vmatmul.mubr.bf16.gmra.mrb[0].mxu0 %v416
        %v639 = vpop.f32.mrb[0].mxu0
        %v640 = vadd.f32 %v475, %v639
        %v641 = vpop.f32.mrb[0].mxu0
        %v642 = vpop.f32.mrb[0].mxu0
        %v643 = vadd.f32 %v475, %v642
        %v644 = vpop.f32.mrb[0].mxu0
        %645 = vmatprep.mubr.bf16.mxu0 0
        %646 = vmatmul.mubr.bf16.gmra.mrb[0].mxu0 %v417
        %v647 = vpop.f32.mrb[0].mxu0
        %v648 = vadd.f32 %v475, %v647
        %v649 = vpop.f32.mrb[0].mxu0
        %v650 = vpop.f32.mrb[0].mxu0
        %v651 = vadd.f32 %v475, %v650
        %v652 = vpop.f32.mrb[0].mxu0
        %653 = vmatprep.mubr.bf16.mxu0 0
        %654 = vmatmul.mubr.bf16.gmra.mrb[0].mxu0 %v418
        %v655 = vpop.f32.mrb[0].mxu0
        %v656 = vadd.f32 %v475, %v655
        %v657 = vpop.f32.mrb[0].mxu0
        %v658 = vpop.f32.mrb[0].mxu0
        %v659 = vadd.f32 %v475, %v658
        %v660 = vpop.f32.mrb[0].mxu0
        %661 = vmatprep.mubr.bf16.mxu0 0
        %662 = vmatmul.mubr.bf16.gmra.mrb[0].mxu0 %v419
        %v663 = vpop.f32.mrb[0].mxu0
        %v664 = vadd.f32 %v475, %v663
        %v665 = vpop.f32.mrb[0].mxu0
        %v666 = vpop.f32.mrb[0].mxu0
        %v667 = vadd.f32 %v475, %v666
        %v668 = vpop.f32.mrb[0].mxu0
        %669 = vmatprep.mubr.bf16.mxu0 0
        %670 = vmatmul.mubr.bf16.gmra.mrb[0].mxu0 %v420
        %v671 = vpop.f32.mrb[0].mxu0
        %v672 = vadd.f32 %v475, %v671
        %v673 = vpop.f32.mrb[0].mxu0
        %v674 = vpop.f32.mrb[0].mxu0
        %v675 = vadd.f32 %v475, %v674
        %v676 = vpop.f32.mrb[0].mxu0
        %677 = vmatprep.mubr.bf16.mxu0 0
        %678 = vmatmul.mubr.bf16.gmra.mrb[0].mxu0 %v421
        %v679 = vpop.f32.mrb[0].mxu0
        %v680 = vadd.f32 %v475, %v679
        %v681 = vpop.f32.mrb[0].mxu0
        %v682 = vpop.f32.mrb[0].mxu0
        %v683 = vadd.f32 %v475, %v682
        %v684 = vpop.f32.mrb[0].mxu0
        %685 = vdwg.mxu0
        %v686 = vpack.c.bf16 %v563, %v560
        %v687 = vpack.c.bf16 %v571, %v568
        %v688 = vpack.c.bf16 %v579, %v576
        %v689 = vpack.c.bf16 %v587, %v584
        %v690 = vpack.c.bf16 %v595, %v592
        %v691 = vpack.c.bf16 %v603, %v600
        %v692 = vpack.c.bf16 %v611, %v608
        %v693 = vpack.c.bf16 %v619, %v616
        %v694 = vpack.c.bf16 %v627, %v624
        %v695 = vpack.c.bf16 %v635, %v632
        %v696 = vpack.c.bf16 %v643, %v640
        %v697 = vpack.c.bf16 %v651, %v648
        %v698 = vpack.c.bf16 %v659, %v656
        %v699 = vpack.c.bf16 %v667, %v664
        %v700 = vpack.c.bf16 %v675, %v672
        %v701 = vpack.c.bf16 %v683, %v680
        %v734 = vunpack.c.l.b16 %v422
        %v735 = vunpack.c.l.b16 %v423
        %v736 = vunpack.c.l.b16 %v424
        %v737 = vunpack.c.l.b16 %v425
        %v738 = vunpack.c.l.b16 %v426
        %v739 = vunpack.c.l.b16 %v427
        %v740 = vunpack.c.l.b16 %v428
        %v741 = vunpack.c.l.b16 %v429
        %v742 = vunpack.c.l.b16 %v430
        %v743 = vunpack.c.l.b16 %v431
        %v744 = vunpack.c.l.b16 %v432
        %v745 = vunpack.c.l.b16 %v433
        %v746 = vunpack.c.l.b16 %v434
        %v747 = vunpack.c.l.b16 %v435
        %v748 = vunpack.c.l.b16 %v436
        %v749 = vunpack.c.l.b16 %v437
        %v750 = vunpack.c.l.b16 %v438
        %v751 = vunpack.c.l.b16 %v439
        %v752 = vunpack.c.l.b16 %v440
        %v753 = vunpack.c.l.b16 %v441
        %v754 = vunpack.c.l.b16 %v442
        %v755 = vunpack.c.l.b16 %v443
        %v756 = vunpack.c.l.b16 %v444
        %v757 = vunpack.c.l.b16 %v445
        %v758 = vunpack.c.l.b16 %v446
        %v759 = vunpack.c.l.b16 %v447
        %v760 = vunpack.c.l.b16 %v448
        %v761 = vunpack.c.l.b16 %v449
        %v762 = vunpack.c.l.b16 %v450
        %v763 = vunpack.c.l.b16 %v451
        %v764 = vunpack.c.l.b16 %v452
        %v765 = vunpack.c.l.b16 %v453
        %v766 = vpack.c.b16 %v735, %v734
        %v767 = vpack.c.b16 %v737, %v736
        %v768 = vpack.c.b16 %v739, %v738
        %v769 = vpack.c.b16 %v741, %v740
        %v770 = vpack.c.b16 %v743, %v742
        %v771 = vpack.c.b16 %v745, %v744
        %v772 = vpack.c.b16 %v747, %v746
        %v773 = vpack.c.b16 %v749, %v748
        %v774 = vpack.c.b16 %v751, %v750
        %v775 = vpack.c.b16 %v753, %v752
        %v776 = vpack.c.b16 %v755, %v754
        %v777 = vpack.c.b16 %v757, %v756
        %v778 = vpack.c.b16 %v759, %v758
        %v779 = vpack.c.b16 %v761, %v760
        %v780 = vpack.c.b16 %v763, %v762
        %v781 = vpack.c.b16 %v765, %v764
        %798 = vmatprep.subr.bf16.mxu0 0
        %799 = vmatpush1.bf16.xpose.msra.mxu0 %v766
        %800 = vmatprep.subr.bf16.mxu0 0
        %801 = vmatpush1.bf16.xpose.msra.mxu0 %v767
        %802 = vmatprep.subr.bf16.mxu0 0
        %803 = vmatpush1.bf16.xpose.msra.mxu0 %v768
        %804 = vmatprep.subr.bf16.mxu0 0
        %805 = vmatpush1.bf16.xpose.msra.mxu0 %v769
        %806 = vmatprep.subr.bf16.mxu0 0
        %807 = vmatpush1.bf16.xpose.msra.mxu0 %v770
        %808 = vmatprep.subr.bf16.mxu0 0
        %809 = vmatpush1.bf16.xpose.msra.mxu0 %v771
        %810 = vmatprep.subr.bf16.mxu0 0
        %811 = vmatpush1.bf16.xpose.msra.mxu0 %v772
        %812 = vmatprep.subr.bf16.mxu0 0
        %813 = vmatpush1.bf16.xpose.msra.mxu0 %v773
        %814 = vmatprep.subr.bf16.mxu0 0
        %815 = vmatpush1.bf16.xpose.msra.mxu0 %v774
        %816 = vmatprep.subr.bf16.mxu0 0
        %817 = vmatpush1.bf16.xpose.msra.mxu0 %v775
        %818 = vmatprep.subr.bf16.mxu0 0
        %819 = vmatpush1.bf16.xpose.msra.mxu0 %v776
        %820 = vmatprep.subr.bf16.mxu0 0
        %821 = vmatpush1.bf16.xpose.msra.mxu0 %v777
        %822 = vmatprep.subr.bf16.mxu0 0
        %823 = vmatpush1.bf16.xpose.msra.mxu0 %v778
        %824 = vmatprep.subr.bf16.mxu0 0
        %825 = vmatpush1.bf16.xpose.msra.mxu0 %v779
        %826 = vmatprep.subr.bf16.mxu0 0
        %827 = vmatpush1.bf16.xpose.msra.mxu0 %v780
        %828 = vmatprep.subr.bf16.mxu0 0
        %829 = vmatpush1.bf16.xpose.msra.mxu0 %v781
        %830 = vmatprep.mubr.bf16.mxu0 0
        %831 = vmatmul.mubr.bf16.gmra.mrb[0].mxu0 %v686
        %v832 = vpop.f32.mrb[0].mxu0
        %v833 = vadd.f32 0.0, %v832
        %v834 = vpop.f32.mrb[0].mxu0
        %v835 = vadd.f32 0.0, %v834
        %v836 = vpop.f32.mrb[0].mxu0
        %v837 = vadd.f32 0.0, %v836
        %v838 = vpop.f32.mrb[0].mxu0
        %v839 = vadd.f32 0.0, %v838
        %840 = vmatprep.mubr.bf16.mxu0 0
        %841 = vmatmul.mubr.bf16.gmra.mrb[0].mxu0 %v687
        %v842 = vpop.f32.mrb[0].mxu0
        %v843 = vadd.f32 0.0, %v842
        %v844 = vpop.f32.mrb[0].mxu0
        %v845 = vadd.f32 0.0, %v844
        %v846 = vpop.f32.mrb[0].mxu0
        %v847 = vadd.f32 0.0, %v846
        %v848 = vpop.f32.mrb[0].mxu0
        %v849 = vadd.f32 0.0, %v848
        %850 = vmatprep.mubr.bf16.mxu0 0
        %851 = vmatmul.mubr.bf16.gmra.mrb[0].mxu0 %v688
        %v852 = vpop.f32.mrb[0].mxu0
        %v853 = vadd.f32 0.0, %v852
        %v854 = vpop.f32.mrb[0].mxu0
        %v855 = vadd.f32 0.0, %v854
        %v856 = vpop.f32.mrb[0].mxu0
        %v857 = vadd.f32 0.0, %v856
        %v858 = vpop.f32.mrb[0].mxu0
        %v859 = vadd.f32 0.0, %v858
        %860 = vmatprep.mubr.bf16.mxu0 0
        %861 = vmatmul.mubr.bf16.gmra.mrb[0].mxu0 %v689
        %v862 = vpop.f32.mrb[0].mxu0
        %v863 = vadd.f32 0.0, %v862
        %v864 = vpop.f32.mrb[0].mxu0
        %v865 = vadd.f32 0.0, %v864
        %v866 = vpop.f32.mrb[0].mxu0
        %v867 = vadd.f32 0.0, %v866
        %v868 = vpop.f32.mrb[0].mxu0
        %v869 = vadd.f32 0.0, %v868
        %870 = vmatprep.mubr.bf16.mxu0 0
        %871 = vmatmul.mubr.bf16.gmra.mrb[0].mxu0 %v690
        %v872 = vpop.f32.mrb[0].mxu0
        %v873 = vadd.f32 0.0, %v872
        %v874 = vpop.f32.mrb[0].mxu0
        %v875 = vadd.f32 0.0, %v874
        %v876 = vpop.f32.mrb[0].mxu0
        %v877 = vadd.f32 0.0, %v876
        %v878 = vpop.f32.mrb[0].mxu0
        %v879 = vadd.f32 0.0, %v878
        %880 = vmatprep.mubr.bf16.mxu0 0
        %881 = vmatmul.mubr.bf16.gmra.mrb[0].mxu0 %v691
        %v882 = vpop.f32.mrb[0].mxu0
        %v883 = vadd.f32 0.0, %v882
        %v884 = vpop.f32.mrb[0].mxu0
        %v885 = vadd.f32 0.0, %v884
        %v886 = vpop.f32.mrb[0].mxu0
        %v887 = vadd.f32 0.0, %v886
        %v888 = vpop.f32.mrb[0].mxu0
        %v889 = vadd.f32 0.0, %v888
        %890 = vmatprep.mubr.bf16.mxu0 0
        %891 = vmatmul.mubr.bf16.gmra.mrb[0].mxu0 %v692
        %v892 = vpop.f32.mrb[0].mxu0
        %v893 = vadd.f32 0.0, %v892
        %v894 = vpop.f32.mrb[0].mxu0
        %v895 = vadd.f32 0.0, %v894
        %v896 = vpop.f32.mrb[0].mxu0
        %v897 = vadd.f32 0.0, %v896
        %v898 = vpop.f32.mrb[0].mxu0
        %v899 = vadd.f32 0.0, %v898
        %900 = vmatprep.mubr.bf16.mxu0 0
        %901 = vmatmul.mubr.bf16.gmra.mrb[0].mxu0 %v693
        %v902 = vpop.f32.mrb[0].mxu0
        %v903 = vadd.f32 0.0, %v902
        %v904 = vpop.f32.mrb[0].mxu0
        %v905 = vadd.f32 0.0, %v904
        %v906 = vpop.f32.mrb[0].mxu0
        %v907 = vadd.f32 0.0, %v906
        %v908 = vpop.f32.mrb[0].mxu0
        %v909 = vadd.f32 0.0, %v908
        %910 = vmatprep.mubr.bf16.mxu0 0
        %911 = vmatmul.mubr.bf16.gmra.mrb[0].mxu0 %v694
        %v912 = vpop.f32.mrb[0].mxu0
        %v913 = vadd.f32 0.0, %v912
        %v914 = vpop.f32.mrb[0].mxu0
        %v915 = vadd.f32 0.0, %v914
        %v916 = vpop.f32.mrb[0].mxu0
        %v917 = vadd.f32 0.0, %v916
        %v918 = vpop.f32.mrb[0].mxu0
        %v919 = vadd.f32 0.0, %v918
        %920 = vmatprep.mubr.bf16.mxu0 0
        %921 = vmatmul.mubr.bf16.gmra.mrb[0].mxu0 %v695
        %v922 = vpop.f32.mrb[0].mxu0
        %v923 = vadd.f32 0.0, %v922
        %v924 = vpop.f32.mrb[0].mxu0
        %v925 = vadd.f32 0.0, %v924
        %v926 = vpop.f32.mrb[0].mxu0
        %v927 = vadd.f32 0.0, %v926
        %v928 = vpop.f32.mrb[0].mxu0
        %v929 = vadd.f32 0.0, %v928
        %930 = vmatprep.mubr.bf16.mxu0 0
        %931 = vmatmul.mubr.bf16.gmra.mrb[0].mxu0 %v696
        %v932 = vpop.f32.mrb[0].mxu0
        %v933 = vadd.f32 0.0, %v932
        %v934 = vpop.f32.mrb[0].mxu0
        %v935 = vadd.f32 0.0, %v934
        %v936 = vpop.f32.mrb[0].mxu0
        %v937 = vadd.f32 0.0, %v936
        %v938 = vpop.f32.mrb[0].mxu0
        %v939 = vadd.f32 0.0, %v938
        %940 = vmatprep.mubr.bf16.mxu0 0
        %941 = vmatmul.mubr.bf16.gmra.mrb[0].mxu0 %v697
        %v942 = vpop.f32.mrb[0].mxu0
        %v943 = vadd.f32 0.0, %v942
        %v944 = vpop.f32.mrb[0].mxu0
        %v945 = vadd.f32 0.0, %v944
        %v946 = vpop.f32.mrb[0].mxu0
        %v947 = vadd.f32 0.0, %v946
        %v948 = vpop.f32.mrb[0].mxu0
        %v949 = vadd.f32 0.0, %v948
        %950 = vmatprep.mubr.bf16.mxu0 0
        %951 = vmatmul.mubr.bf16.gmra.mrb[0].mxu0 %v698
        %v952 = vpop.f32.mrb[0].mxu0
        %v953 = vadd.f32 0.0, %v952
        %v954 = vpop.f32.mrb[0].mxu0
        %v955 = vadd.f32 0.0, %v954
        %v956 = vpop.f32.mrb[0].mxu0
        %v957 = vadd.f32 0.0, %v956
        %v958 = vpop.f32.mrb[0].mxu0
        %v959 = vadd.f32 0.0, %v958
        %960 = vmatprep.mubr.bf16.mxu0 0
        %961 = vmatmul.mubr.bf16.gmra.mrb[0].mxu0 %v699
        %v962 = vpop.f32.mrb[0].mxu0
        %v963 = vadd.f32 0.0, %v962
        %v964 = vpop.f32.mrb[0].mxu0
        %v965 = vadd.f32 0.0, %v964
        %v966 = vpop.f32.mrb[0].mxu0
        %v967 = vadd.f32 0.0, %v966
        %v968 = vpop.f32.mrb[0].mxu0
        %v969 = vadd.f32 0.0, %v968
        %970 = vmatprep.mubr.bf16.mxu0 0
        %971 = vmatmul.mubr.bf16.gmra.mrb[0].mxu0 %v700
        %v972 = vpop.f32.mrb[0].mxu0
        %v973 = vadd.f32 0.0, %v972
        %v974 = vpop.f32.mrb[0].mxu0
        %v975 = vadd.f32 0.0, %v974
        %v976 = vpop.f32.mrb[0].mxu0
        %v977 = vadd.f32 0.0, %v976
        %v978 = vpop.f32.mrb[0].mxu0
        %v979 = vadd.f32 0.0, %v978
        %980 = vmatprep.mubr.bf16.mxu0 0
        %981 = vmatmul.mubr.bf16.gmra.mrb[0].mxu0 %v701
        %v982 = vpop.f32.mrb[0].mxu0
        %v983 = vadd.f32 0.0, %v982
        %v984 = vpop.f32.mrb[0].mxu0
        %v985 = vadd.f32 0.0, %v984
        %v986 = vpop.f32.mrb[0].mxu0
        %v987 = vadd.f32 0.0, %v986
        %v988 = vpop.f32.mrb[0].mxu0
        %v989 = vadd.f32 0.0, %v988
        %990 = vdwg.mxu0
        %v991 = vmax.f32 %v833, %v835
        %992 = vmax.xlane.f32.xlu0 %v991
        %v993 = vpop.xlane.xlu0 %992
        %v994 = vmax.f32 %v837, %v839
        %995 = vmax.xlane.f32.xlu0 %v994
        %v996 = vpop.xlane.xlu0 %995
        %v997 = vmax.f32 %v843, %v845
        %998 = vmax.xlane.f32.xlu0 %v997
        %v999 = vpop.xlane.xlu0 %998
        %v1000 = vmax.f32 %v847, %v849
        %1001 = vmax.xlane.f32.xlu0 %v1000
        %v1002 = vpop.xlane.xlu0 %1001
        %v1003 = vmax.f32 %v853, %v855
        %1004 = vmax.xlane.f32.xlu0 %v1003
        %v1005 = vpop.xlane.xlu0 %1004
        %v1006 = vmax.f32 %v857, %v859
        %1007 = vmax.xlane.f32.xlu0 %v1006
        %v1008 = vpop.xlane.xlu0 %1007
        %v1009 = vmax.f32 %v863, %v865
        %1010 = vmax.xlane.f32.xlu0 %v1009
        %v1011 = vpop.xlane.xlu0 %1010
        %v1012 = vmax.f32 %v867, %v869
        %1013 = vmax.xlane.f32.xlu0 %v1012
        %v1014 = vpop.xlane.xlu0 %1013
        %v1015 = vmax.f32 %v873, %v875
        %1016 = vmax.xlane.f32.xlu0 %v1015
        %v1017 = vpop.xlane.xlu0 %1016
        %v1018 = vmax.f32 %v877, %v879
        %1019 = vmax.xlane.f32.xlu0 %v1018
        %v1020 = vpop.xlane.xlu0 %1019
        %v1021 = vmax.f32 %v883, %v885
        %1022 = vmax.xlane.f32.xlu0 %v1021
        %v1023 = vpop.xlane.xlu0 %1022
        %v1024 = vmax.f32 %v887, %v889
        %1025 = vmax.xlane.f32.xlu0 %v1024
        %v1026 = vpop.xlane.xlu0 %1025
        %v1027 = vmax.f32 %v893, %v895
        %1028 = vmax.xlane.f32.xlu0 %v1027
        %v1029 = vpop.xlane.xlu0 %1028
        %v1030 = vmax.f32 %v897, %v899
        %1031 = vmax.xlane.f32.xlu0 %v1030
        %v1032 = vpop.xlane.xlu0 %1031
        %v1033 = vmax.f32 %v903, %v905
        %1034 = vmax.xlane.f32.xlu0 %v1033
        %v1035 = vpop.xlane.xlu0 %1034
        %v1036 = vmax.f32 %v907, %v909
        %1037 = vmax.xlane.f32.xlu0 %v1036
        %v1038 = vpop.xlane.xlu0 %1037
        %v1039 = vmax.f32 %v913, %v915
        %1040 = vmax.xlane.f32.xlu0 %v1039
        %v1041 = vpop.xlane.xlu0 %1040
        %v1042 = vmax.f32 %v917, %v919
        %1043 = vmax.xlane.f32.xlu0 %v1042
        %v1044 = vpop.xlane.xlu0 %1043
        %v1045 = vmax.f32 %v923, %v925
        %1046 = vmax.xlane.f32.xlu0 %v1045
        %v1047 = vpop.xlane.xlu0 %1046
        %v1048 = vmax.f32 %v927, %v929
        %1049 = vmax.xlane.f32.xlu0 %v1048
        %v1050 = vpop.xlane.xlu0 %1049
        %v1051 = vmax.f32 %v933, %v935
        %1052 = vmax.xlane.f32.xlu0 %v1051
        %v1053 = vpop.xlane.xlu0 %1052
        %v1054 = vmax.f32 %v937, %v939
        %1055 = vmax.xlane.f32.xlu0 %v1054
        %v1056 = vpop.xlane.xlu0 %1055
        %v1057 = vmax.f32 %v943, %v945
        %1058 = vmax.xlane.f32.xlu0 %v1057
        %v1059 = vpop.xlane.xlu0 %1058
        %v1060 = vmax.f32 %v947, %v949
        %1061 = vmax.xlane.f32.xlu0 %v1060
        %v1062 = vpop.xlane.xlu0 %1061
        %v1063 = vmax.f32 %v953, %v955
        %1064 = vmax.xlane.f32.xlu0 %v1063
        %v1065 = vpop.xlane.xlu0 %1064
        %v1066 = vmax.f32 %v957, %v959
        %1067 = vmax.xlane.f32.xlu0 %v1066
        %v1068 = vpop.xlane.xlu0 %1067
        %v1069 = vmax.f32 %v963, %v965
        %1070 = vmax.xlane.f32.xlu0 %v1069
        %v1071 = vpop.xlane.xlu0 %1070
        %v1072 = vmax.f32 %v967, %v969
        %1073 = vmax.xlane.f32.xlu0 %v1072
        %v1074 = vpop.xlane.xlu0 %1073
        %v1075 = vmax.f32 %v973, %v975
        %1076 = vmax.xlane.f32.xlu0 %v1075
        %v1077 = vpop.xlane.xlu0 %1076
        %v1078 = vmax.f32 %v977, %v979
        %1079 = vmax.xlane.f32.xlu0 %v1078
        %v1080 = vpop.xlane.xlu0 %1079
        %v1081 = vmax.f32 %v983, %v985
        %1082 = vmax.xlane.f32.xlu0 %v1081
        %v1083 = vpop.xlane.xlu0 %1082
        %v1084 = vmax.f32 %v987, %v989
        %1085 = vmax.xlane.f32.xlu0 %v1084
        %v1086 = vpop.xlane.xlu0 %1085
        %v1087 = vsub.f32 %v833, %v993
        %v1088 = vsub.f32 %v835, %v993
        %v1089 = vsub.f32 %v837, %v996
        %v1090 = vsub.f32 %v839, %v996
        %v1091 = vsub.f32 %v843, %v999
        %v1092 = vsub.f32 %v845, %v999
        %v1093 = vsub.f32 %v847, %v1002
        %v1094 = vsub.f32 %v849, %v1002
        %v1095 = vsub.f32 %v853, %v1005
        %v1096 = vsub.f32 %v855, %v1005
        %v1097 = vsub.f32 %v857, %v1008
        %v1098 = vsub.f32 %v859, %v1008
        %v1099 = vsub.f32 %v863, %v1011
        %v1100 = vsub.f32 %v865, %v1011
        %v1101 = vsub.f32 %v867, %v1014
        %v1102 = vsub.f32 %v869, %v1014
        %v1103 = vsub.f32 %v873, %v1017
        %v1104 = vsub.f32 %v875, %v1017
        %v1105 = vsub.f32 %v877, %v1020
        %v1106 = vsub.f32 %v879, %v1020
        %v1107 = vsub.f32 %v883, %v1023
        %v1108 = vsub.f32 %v885, %v1023
        %v1109 = vsub.f32 %v887, %v1026
        %v1110 = vsub.f32 %v889, %v1026
        %v1111 = vsub.f32 %v893, %v1029
        %v1112 = vsub.f32 %v895, %v1029
        %v1113 = vsub.f32 %v897, %v1032
        %v1114 = vsub.f32 %v899, %v1032
        %v1115 = vsub.f32 %v903, %v1035
        %v1116 = vsub.f32 %v905, %v1035
        %v1117 = vsub.f32 %v907, %v1038
        %v1118 = vsub.f32 %v909, %v1038
        %v1119 = vsub.f32 %v913, %v1041
        %v1120 = vsub.f32 %v915, %v1041
        %v1121 = vsub.f32 %v917, %v1044
        %v1122 = vsub.f32 %v919, %v1044
        %v1123 = vsub.f32 %v923, %v1047
        %v1124 = vsub.f32 %v925, %v1047
        %v1125 = vsub.f32 %v927, %v1050
        %v1126 = vsub.f32 %v929, %v1050
        %v1127 = vsub.f32 %v933, %v1053
        %v1128 = vsub.f32 %v935, %v1053
        %v1129 = vsub.f32 %v937, %v1056
        %v1130 = vsub.f32 %v939, %v1056
        %v1131 = vsub.f32 %v943, %v1059
        %v1132 = vsub.f32 %v945, %v1059
        %v1133 = vsub.f32 %v947, %v1062
        %v1134 = vsub.f32 %v949, %v1062
        %v1135 = vsub.f32 %v953, %v1065
        %v1136 = vsub.f32 %v955, %v1065
        %v1137 = vsub.f32 %v957, %v1068
        %v1138 = vsub.f32 %v959, %v1068
        %v1139 = vsub.f32 %v963, %v1071
        %v1140 = vsub.f32 %v965, %v1071
        %v1141 = vsub.f32 %v967, %v1074
        %v1142 = vsub.f32 %v969, %v1074
        %v1143 = vsub.f32 %v973, %v1077
        %v1144 = vsub.f32 %v975, %v1077
        %v1145 = vsub.f32 %v977, %v1080
        %v1146 = vsub.f32 %v979, %v1080
        %v1147 = vsub.f32 %v983, %v1083
        %v1148 = vsub.f32 %v985, %v1083
        %v1149 = vsub.f32 %v987, %v1086
        %v1150 = vsub.f32 %v989, %v1086
        %v1151 = vmul.f32 %v1087, 1.442695
        %v1152 = vpow.pop %v1151
        %v1153 = vmul.f32 %v1088, 1.442695
        %v1154 = vpow.pop %v1153
        %v1155 = vmul.f32 %v1089, 1.442695
        %v1156 = vpow.pop %v1155
        %v1157 = vmul.f32 %v1090, 1.442695
        %v1158 = vpow.pop %v1157
        %v1159 = vmul.f32 %v1091, 1.442695
        %v1160 = vpow.pop %v1159
        %v1161 = vmul.f32 %v1092, 1.442695
        %v1162 = vpow.pop %v1161
        %v1163 = vmul.f32 %v1093, 1.442695
        %v1164 = vpow.pop %v1163
        %v1165 = vmul.f32 %v1094, 1.442695
        %v1166 = vpow.pop %v1165
        %v1167 = vmul.f32 %v1095, 1.442695
        %v1168 = vpow.pop %v1167
        %v1169 = vmul.f32 %v1096, 1.442695
        %v1170 = vpow.pop %v1169
        %v1171 = vmul.f32 %v1097, 1.442695
        %v1172 = vpow.pop %v1171
        %v1173 = vmul.f32 %v1098, 1.442695
        %v1174 = vpow.pop %v1173
        %v1175 = vmul.f32 %v1099, 1.442695
        %v1176 = vpow.pop %v1175
        %v1177 = vmul.f32 %v1100, 1.442695
        %v1178 = vpow.pop %v1177
        %v1179 = vmul.f32 %v1101, 1.442695
        %v1180 = vpow.pop %v1179
        %v1181 = vmul.f32 %v1102, 1.442695
        %v1182 = vpow.pop %v1181
        %v1183 = vmul.f32 %v1103, 1.442695
        %v1184 = vpow.pop %v1183
        %v1185 = vmul.f32 %v1104, 1.442695
        %v1186 = vpow.pop %v1185
        %v1187 = vmul.f32 %v1105, 1.442695
        %v1188 = vpow.pop %v1187
        %v1189 = vmul.f32 %v1106, 1.442695
        %v1190 = vpow.pop %v1189
        %v1191 = vmul.f32 %v1107, 1.442695
        %v1192 = vpow.pop %v1191
        %v1193 = vmul.f32 %v1108, 1.442695
        %v1194 = vpow.pop %v1193
        %v1195 = vmul.f32 %v1109, 1.442695
        %v1196 = vpow.pop %v1195
        %v1197 = vmul.f32 %v1110, 1.442695
        %v1198 = vpow.pop %v1197
        %v1199 = vmul.f32 %v1111, 1.442695
        %v1200 = vpow.pop %v1199
        %v1201 = vmul.f32 %v1112, 1.442695
        %v1202 = vpow.pop %v1201
        %v1203 = vmul.f32 %v1113, 1.442695
        %v1204 = vpow.pop %v1203
        %v1205 = vmul.f32 %v1114, 1.442695
        %v1206 = vpow.pop %v1205
        %v1207 = vmul.f32 %v1115, 1.442695
        %v1208 = vpow.pop %v1207
        %v1209 = vmul.f32 %v1116, 1.442695
        %v1210 = vpow.pop %v1209
        %v1211 = vmul.f32 %v1117, 1.442695
        %v1212 = vpow.pop %v1211
        %v1213 = vmul.f32 %v1118, 1.442695
        %v1214 = vpow.pop %v1213
        %v1215 = vmul.f32 %v1119, 1.442695
        %v1216 = vpow.pop %v1215
        %v1217 = vmul.f32 %v1120, 1.442695
        %v1218 = vpow.pop %v1217
        %v1219 = vmul.f32 %v1121, 1.442695
        %v1220 = vpow.pop %v1219
        %v1221 = vmul.f32 %v1122, 1.442695
        %v1222 = vpow.pop %v1221
        %v1223 = vmul.f32 %v1123, 1.442695
        %v1224 = vpow.pop %v1223
        %v1225 = vmul.f32 %v1124, 1.442695
        %v1226 = vpow.pop %v1225
        %v1227 = vmul.f32 %v1125, 1.442695
        %v1228 = vpow.pop %v1227
        %v1229 = vmul.f32 %v1126, 1.442695
        %v1230 = vpow.pop %v1229
        %v1231 = vmul.f32 %v1127, 1.442695
        %v1232 = vpow.pop %v1231
        %v1233 = vmul.f32 %v1128, 1.442695
        %v1234 = vpow.pop %v1233
        %v1235 = vmul.f32 %v1129, 1.442695
        %v1236 = vpow.pop %v1235
        %v1237 = vmul.f32 %v1130, 1.442695
        %v1238 = vpow.pop %v1237
        %v1239 = vmul.f32 %v1131, 1.442695
        %v1240 = vpow.pop %v1239
        %v1241 = vmul.f32 %v1132, 1.442695
        %v1242 = vpow.pop %v1241
        %v1243 = vmul.f32 %v1133, 1.442695
        %v1244 = vpow.pop %v1243
        %v1245 = vmul.f32 %v1134, 1.442695
        %v1246 = vpow.pop %v1245
        %v1247 = vmul.f32 %v1135, 1.442695
        %v1248 = vpow.pop %v1247
        %v1249 = vmul.f32 %v1136, 1.442695
        %v1250 = vpow.pop %v1249
        %v1251 = vmul.f32 %v1137, 1.442695
        %v1252 = vpow.pop %v1251
        %v1253 = vmul.f32 %v1138, 1.442695
        %v1254 = vpow.pop %v1253
        %v1255 = vmul.f32 %v1139, 1.442695
        %v1256 = vpow.pop %v1255
        %v1257 = vmul.f32 %v1140, 1.442695
        %v1258 = vpow.pop %v1257
        %v1259 = vmul.f32 %v1141, 1.442695
        %v1260 = vpow.pop %v1259
        %v1261 = vmul.f32 %v1142, 1.442695
        %v1262 = vpow.pop %v1261
        %v1263 = vmul.f32 %v1143, 1.442695
        %v1264 = vpow.pop %v1263
        %v1265 = vmul.f32 %v1144, 1.442695
        %v1266 = vpow.pop %v1265
        %v1267 = vmul.f32 %v1145, 1.442695
        %v1268 = vpow.pop %v1267
        %v1269 = vmul.f32 %v1146, 1.442695
        %v1270 = vpow.pop %v1269
        %v1271 = vmul.f32 %v1147, 1.442695
        %v1272 = vpow.pop %v1271
        %v1273 = vmul.f32 %v1148, 1.442695
        %v1274 = vpow.pop %v1273
        %v1275 = vmul.f32 %v1149, 1.442695
        %v1276 = vpow.pop %v1275
        %v1277 = vmul.f32 %v1150, 1.442695
        %v1278 = vpow.pop %v1277
        %v1279 = vadd.f32 %v1152, %v1154
        %1280 = vadd.xlane.f32.xlu0 %v1279
        %v1281 = vpop.xlane.xlu0 %1280
        %v1282 = vadd.f32 %v1156, %v1158
        %1283 = vadd.xlane.f32.xlu0 %v1282
        %v1284 = vpop.xlane.xlu0 %1283
        %v1285 = vadd.f32 %v1160, %v1162
        %1286 = vadd.xlane.f32.xlu0 %v1285
        %v1287 = vpop.xlane.xlu0 %1286
        %v1288 = vadd.f32 %v1164, %v1166
        %1289 = vadd.xlane.f32.xlu0 %v1288
        %v1290 = vpop.xlane.xlu0 %1289
        %v1291 = vadd.f32 %v1168, %v1170
        %1292 = vadd.xlane.f32.xlu0 %v1291
        %v1293 = vpop.xlane.xlu0 %1292
        %v1294 = vadd.f32 %v1172, %v1174
        %1295 = vadd.xlane.f32.xlu0 %v1294
        %v1296 = vpop.xlane.xlu0 %1295
        %v1297 = vadd.f32 %v1176, %v1178
        %1298 = vadd.xlane.f32.xlu0 %v1297
        %v1299 = vpop.xlane.xlu0 %1298
        %v1300 = vadd.f32 %v1180, %v1182
        %1301 = vadd.xlane.f32.xlu0 %v1300
        %v1302 = vpop.xlane.xlu0 %1301
        %v1303 = vadd.f32 %v1184, %v1186
        %1304 = vadd.xlane.f32.xlu0 %v1303
        %v1305 = vpop.xlane.xlu0 %1304
        %v1306 = vadd.f32 %v1188, %v1190
        %1307 = vadd.xlane.f32.xlu0 %v1306
        %v1308 = vpop.xlane.xlu0 %1307
        %v1309 = vadd.f32 %v1192, %v1194
        %1310 = vadd.xlane.f32.xlu0 %v1309
        %v1311 = vpop.xlane.xlu0 %1310
        %v1312 = vadd.f32 %v1196, %v1198
        %1313 = vadd.xlane.f32.xlu0 %v1312
        %v1314 = vpop.xlane.xlu0 %1313
        %v1315 = vadd.f32 %v1200, %v1202
        %1316 = vadd.xlane.f32.xlu0 %v1315
        %v1317 = vpop.xlane.xlu0 %1316
        %v1318 = vadd.f32 %v1204, %v1206
        %1319 = vadd.xlane.f32.xlu0 %v1318
        %v1320 = vpop.xlane.xlu0 %1319
        %v1321 = vadd.f32 %v1208, %v1210
        %1322 = vadd.xlane.f32.xlu0 %v1321
        %v1323 = vpop.xlane.xlu0 %1322
        %v1324 = vadd.f32 %v1212, %v1214
        %1325 = vadd.xlane.f32.xlu0 %v1324
        %v1326 = vpop.xlane.xlu0 %1325
        %v1327 = vadd.f32 %v1216, %v1218
        %1328 = vadd.xlane.f32.xlu0 %v1327
        %v1329 = vpop.xlane.xlu0 %1328
        %v1330 = vadd.f32 %v1220, %v1222
        %1331 = vadd.xlane.f32.xlu0 %v1330
        %v1332 = vpop.xlane.xlu0 %1331
        %v1333 = vadd.f32 %v1224, %v1226
        %1334 = vadd.xlane.f32.xlu0 %v1333
        %v1335 = vpop.xlane.xlu0 %1334
        %v1336 = vadd.f32 %v1228, %v1230
        %1337 = vadd.xlane.f32.xlu0 %v1336
        %v1338 = vpop.xlane.xlu0 %1337
        %v1339 = vadd.f32 %v1232, %v1234
        %1340 = vadd.xlane.f32.xlu0 %v1339
        %v1341 = vpop.xlane.xlu0 %1340
        %v1342 = vadd.f32 %v1236, %v1238
        %1343 = vadd.xlane.f32.xlu0 %v1342
        %v1344 = vpop.xlane.xlu0 %1343
        %v1345 = vadd.f32 %v1240, %v1242
        %1346 = vadd.xlane.f32.xlu0 %v1345
        %v1347 = vpop.xlane.xlu0 %1346
        %v1348 = vadd.f32 %v1244, %v1246
        %1349 = vadd.xlane.f32.xlu0 %v1348
        %v1350 = vpop.xlane.xlu0 %1349
        %v1351 = vadd.f32 %v1248, %v1250
        %1352 = vadd.xlane.f32.xlu0 %v1351
        %v1353 = vpop.xlane.xlu0 %1352
        %v1354 = vadd.f32 %v1252, %v1254
        %1355 = vadd.xlane.f32.xlu0 %v1354
        %v1356 = vpop.xlane.xlu0 %1355
        %v1357 = vadd.f32 %v1256, %v1258
        %1358 = vadd.xlane.f32.xlu0 %v1357
        %v1359 = vpop.xlane.xlu0 %1358
        %v1360 = vadd.f32 %v1260, %v1262
        %1361 = vadd.xlane.f32.xlu0 %v1360
        %v1362 = vpop.xlane.xlu0 %1361
        %v1363 = vadd.f32 %v1264, %v1266
        %1364 = vadd.xlane.f32.xlu0 %v1363
        %v1365 = vpop.xlane.xlu0 %1364
        %v1366 = vadd.f32 %v1268, %v1270
        %1367 = vadd.xlane.f32.xlu0 %v1366
        %v1368 = vpop.xlane.xlu0 %1367
        %v1369 = vadd.f32 %v1272, %v1274
        %1370 = vadd.xlane.f32.xlu0 %v1369
        %v1371 = vpop.xlane.xlu0 %1370
        %v1372 = vadd.f32 %v1276, %v1278
        %1373 = vadd.xlane.f32.xlu0 %v1372
        %v1374 = vpop.xlane.xlu0 %1373
        %v1375 = vrcp.pop %v1281
        %v1376 = vrcp.pop %v1284
        %v1377 = vrcp.pop %v1287
        %v1378 = vrcp.pop %v1290
        %v1379 = vrcp.pop %v1293
        %v1380 = vrcp.pop %v1296
        %v1381 = vrcp.pop %v1299
        %v1382 = vrcp.pop %v1302
        %v1383 = vrcp.pop %v1305
        %v1384 = vrcp.pop %v1308
        %v1385 = vrcp.pop %v1311
        %v1386 = vrcp.pop %v1314
        %v1387 = vrcp.pop %v1317
        %v1388 = vrcp.pop %v1320
        %v1389 = vrcp.pop %v1323
        %v1390 = vrcp.pop %v1326
        %v1391 = vrcp.pop %v1329
        %v1392 = vrcp.pop %v1332
        %v1393 = vrcp.pop %v1335
        %v1394 = vrcp.pop %v1338
        %v1395 = vrcp.pop %v1341
        %v1396 = vrcp.pop %v1344
        %v1397 = vrcp.pop %v1347
        %v1398 = vrcp.pop %v1350
        %v1399 = vrcp.pop %v1353
        %v1400 = vrcp.pop %v1356
        %v1401 = vrcp.pop %v1359
        %v1402 = vrcp.pop %v1362
        %v1403 = vrcp.pop %v1365
        %v1404 = vrcp.pop %v1368
        %v1405 = vrcp.pop %v1371
        %v1406 = vrcp.pop %v1374
        %v1407 = vmul.f32 %v1152, %v1375
        %v1408 = vmul.f32 %v1154, %v1375
        %v1409 = vmul.f32 %v1156, %v1376
        %v1410 = vmul.f32 %v1158, %v1376
        %v1411 = vmul.f32 %v1160, %v1377
        %v1412 = vmul.f32 %v1162, %v1377
        %v1413 = vmul.f32 %v1164, %v1378
        %v1414 = vmul.f32 %v1166, %v1378
        %v1415 = vmul.f32 %v1168, %v1379
        %v1416 = vmul.f32 %v1170, %v1379
        %v1417 = vmul.f32 %v1172, %v1380
        %v1418 = vmul.f32 %v1174, %v1380
        %v1419 = vmul.f32 %v1176, %v1381
        %v1420 = vmul.f32 %v1178, %v1381
        %v1421 = vmul.f32 %v1180, %v1382
        %v1422 = vmul.f32 %v1182, %v1382
        %v1423 = vmul.f32 %v1184, %v1383
        %v1424 = vmul.f32 %v1186, %v1383
        %v1425 = vmul.f32 %v1188, %v1384
        %v1426 = vmul.f32 %v1190, %v1384
        %v1427 = vmul.f32 %v1192, %v1385
        %v1428 = vmul.f32 %v1194, %v1385
        %v1429 = vmul.f32 %v1196, %v1386
        %v1430 = vmul.f32 %v1198, %v1386
        %v1431 = vmul.f32 %v1200, %v1387
        %v1432 = vmul.f32 %v1202, %v1387
        %v1433 = vmul.f32 %v1204, %v1388
        %v1434 = vmul.f32 %v1206, %v1388
        %v1435 = vmul.f32 %v1208, %v1389
        %v1436 = vmul.f32 %v1210, %v1389
        %v1437 = vmul.f32 %v1212, %v1390
        %v1438 = vmul.f32 %v1214, %v1390
        %v1439 = vmul.f32 %v1216, %v1391
        %v1440 = vmul.f32 %v1218, %v1391
        %v1441 = vmul.f32 %v1220, %v1392
        %v1442 = vmul.f32 %v1222, %v1392
        %v1443 = vmul.f32 %v1224, %v1393
        %v1444 = vmul.f32 %v1226, %v1393
        %v1445 = vmul.f32 %v1228, %v1394
        %v1446 = vmul.f32 %v1230, %v1394
        %v1447 = vmul.f32 %v1232, %v1395
        %v1448 = vmul.f32 %v1234, %v1395
        %v1449 = vmul.f32 %v1236, %v1396
        %v1450 = vmul.f32 %v1238, %v1396
        %v1451 = vmul.f32 %v1240, %v1397
        %v1452 = vmul.f32 %v1242, %v1397
        %v1453 = vmul.f32 %v1244, %v1398
        %v1454 = vmul.f32 %v1246, %v1398
        %v1455 = vmul.f32 %v1248, %v1399
        %v1456 = vmul.f32 %v1250, %v1399
        %v1457 = vmul.f32 %v1252, %v1400
        %v1458 = vmul.f32 %v1254, %v1400
        %v1459 = vmul.f32 %v1256, %v1401
        %v1460 = vmul.f32 %v1258, %v1401
        %v1461 = vmul.f32 %v1260, %v1402
        %v1462 = vmul.f32 %v1262, %v1402
        %v1463 = vmul.f32 %v1264, %v1403
        %v1464 = vmul.f32 %v1266, %v1403
        %v1465 = vmul.f32 %v1268, %v1404
        %v1466 = vmul.f32 %v1270, %v1404
        %v1467 = vmul.f32 %v1272, %v1405
        %v1468 = vmul.f32 %v1274, %v1405
        %v1469 = vmul.f32 %v1276, %v1406
        %v1470 = vmul.f32 %v1278, %v1406
        %v1471 = vpack.c.bf16 %v1409, %v1407
        %v1472 = vpack.c.bf16 %v1410, %v1408
        %v1473 = vpack.c.bf16 %v1413, %v1411
        %v1474 = vpack.c.bf16 %v1414, %v1412
        %v1475 = vpack.c.bf16 %v1417, %v1415
        %v1476 = vpack.c.bf16 %v1418, %v1416
        %v1477 = vpack.c.bf16 %v1421, %v1419
        %v1478 = vpack.c.bf16 %v1422, %v1420
        %v1479 = vpack.c.bf16 %v1425, %v1423
        %v1480 = vpack.c.bf16 %v1426, %v1424
        %v1481 = vpack.c.bf16 %v1429, %v1427
        %v1482 = vpack.c.bf16 %v1430, %v1428
        %v1483 = vpack.c.bf16 %v1433, %v1431
        %v1484 = vpack.c.bf16 %v1434, %v1432
        %v1485 = vpack.c.bf16 %v1437, %v1435
        %v1486 = vpack.c.bf16 %v1438, %v1436
        %v1487 = vpack.c.bf16 %v1441, %v1439
        %v1488 = vpack.c.bf16 %v1442, %v1440
        %v1489 = vpack.c.bf16 %v1445, %v1443
        %v1490 = vpack.c.bf16 %v1446, %v1444
        %v1491 = vpack.c.bf16 %v1449, %v1447
        %v1492 = vpack.c.bf16 %v1450, %v1448
        %v1493 = vpack.c.bf16 %v1453, %v1451
        %v1494 = vpack.c.bf16 %v1454, %v1452
        %v1495 = vpack.c.bf16 %v1457, %v1455
        %v1496 = vpack.c.bf16 %v1458, %v1456
        %v1497 = vpack.c.bf16 %v1461, %v1459
        %v1498 = vpack.c.bf16 %v1462, %v1460
        %v1499 = vpack.c.bf16 %v1465, %v1463
        %v1500 = vpack.c.bf16 %v1466, %v1464
        %v1501 = vpack.c.bf16 %v1469, %v1467
        %v1502 = vpack.c.bf16 %v1470, %v1468
        %1503 = vst [vmem:[%s341] sm:$0xff] %v1407
        %1504 = vst [vmem:[%s341 + $0x8] sm:$0xff] %v1408
        %1505 = vst [vmem:[%s341 + $0x10] sm:$0xff] %v1409
        %1506 = vst [vmem:[%s341 + $0x18] sm:$0xff] %v1410
        %1507 = vst [vmem:[%s341 + $0x20] sm:$0xff] %v1411
        %1508 = vst [vmem:[%s341 + $0x28] sm:$0xff] %v1412
        %1509 = vst [vmem:[%s341 + $0x30] sm:$0xff] %v1413
        %1510 = vst [vmem:[%s341 + $0x38] sm:$0xff] %v1414
        %1511 = vst [vmem:[%s341 + $0x40] sm:$0xff] %v1415
        %1512 = vst [vmem:[%s341 + $0x48] sm:$0xff] %v1416
        %1513 = vst [vmem:[%s341 + $0x50] sm:$0xff] %v1417
        %1514 = vst [vmem:[%s341 + $0x58] sm:$0xff] %v1418
        %1515 = vst [vmem:[%s341 + $0x60] sm:$0xff] %v1419
        %1516 = vst [vmem:[%s341 + $0x68] sm:$0xff] %v1420
        %1517 = vst [vmem:[%s341 + $0x70] sm:$0xff] %v1421
        %1518 = vst [vmem:[%s341 + $0x78] sm:$0xff] %v1422
        %1519 = vst [vmem:[%s341 + $0x80] sm:$0xff] %v1423
        %1520 = vst [vmem:[%s341 + $0x88] sm:$0xff] %v1424
        %1521 = vst [vmem:[%s341 + $0x90] sm:$0xff] %v1425
        %1522 = vst [vmem:[%s341 + $0x98] sm:$0xff] %v1426
        %1523 = vst [vmem:[%s341 + $0xa0] sm:$0xff] %v1427
        %1524 = vst [vmem:[%s341 + $0xa8] sm:$0xff] %v1428
        %1525 = vst [vmem:[%s341 + $0xb0] sm:$0xff] %v1429
        %1526 = vst [vmem:[%s341 + $0xb8] sm:$0xff] %v1430
        %1527 = vst [vmem:[%s341 + $0xc0] sm:$0xff] %v1431
        %1528 = vst [vmem:[%s341 + $0xc8] sm:$0xff] %v1432
        %1529 = vst [vmem:[%s341 + $0xd0] sm:$0xff] %v1433
        %1530 = vst [vmem:[%s341 + $0xd8] sm:$0xff] %v1434
        %1531 = vst [vmem:[%s341 + $0xe0] sm:$0xff] %v1435
        %1532 = vst [vmem:[%s341 + $0xe8] sm:$0xff] %v1436
        %1533 = vst [vmem:[%s341 + $0xf0] sm:$0xff] %v1437
        %1534 = vst [vmem:[%s341 + $0xf8] sm:$0xff] %v1438
        %1535 = vst [vmem:[%s341 + $0x100] sm:$0xff] %v1439
        %1536 = vst [vmem:[%s341 + $0x108] sm:$0xff] %v1440
        %1537 = vst [vmem:[%s341 + $0x110] sm:$0xff] %v1441
        %1538 = vst [vmem:[%s341 + $0x118] sm:$0xff] %v1442
        %1539 = vst [vmem:[%s341 + $0x120] sm:$0xff] %v1443
        %1540 = vst [vmem:[%s341 + $0x128] sm:$0xff] %v1444
        %1541 = vst [vmem:[%s341 + $0x130] sm:$0xff] %v1445
        %1542 = vst [vmem:[%s341 + $0x138] sm:$0xff] %v1446
        %1543 = vst [vmem:[%s341 + $0x140] sm:$0xff] %v1447
        %1544 = vst [vmem:[%s341 + $0x148] sm:$0xff] %v1448
        %1545 = vst [vmem:[%s341 + $0x150] sm:$0xff] %v1449
        %1546 = vst [vmem:[%s341 + $0x158] sm:$0xff] %v1450
        %1547 = vst [vmem:[%s341 + $0x160] sm:$0xff] %v1451
        %1548 = vst [vmem:[%s341 + $0x168] sm:$0xff] %v1452
        %1549 = vst [vmem:[%s341 + $0x170] sm:$0xff] %v1453
        %1550 = vst [vmem:[%s341 + $0x178] sm:$0xff] %v1454
        %1551 = vst [vmem:[%s341 + $0x180] sm:$0xff] %v1455
        %1552 = vst [vmem:[%s341 + $0x188] sm:$0xff] %v1456
        %1553 = vst [vmem:[%s341 + $0x190] sm:$0xff] %v1457
        %1554 = vst [vmem:[%s341 + $0x198] sm:$0xff] %v1458
        %1555 = vst [vmem:[%s341 + $0x1a0] sm:$0xff] %v1459
        %1556 = vst [vmem:[%s341 + $0x1a8] sm:$0xff] %v1460
        %1557 = vst [vmem:[%s341 + $0x1b0] sm:$0xff] %v1461
        %1558 = vst [vmem:[%s341 + $0x1b8] sm:$0xff] %v1462
        %1559 = vst [vmem:[%s341 + $0x1c0] sm:$0xff] %v1463
        %1560 = vst [vmem:[%s341 + $0x1c8] sm:$0xff] %v1464
        %1561 = vst [vmem:[%s341 + $0x1d0] sm:$0xff] %v1465
        %1562 = vst [vmem:[%s341 + $0x1d8] sm:$0xff] %v1466
        %1563 = vst [vmem:[%s341 + $0x1e0] sm:$0xff] %v1467
        %1564 = vst [vmem:[%s341 + $0x1e8] sm:$0xff] %v1468
        %1565 = vst [vmem:[%s341 + $0x1f0] sm:$0xff] %v1469
        %1566 = vst [vmem:[%s341 + $0x1f8] sm:$0xff] %v1470
        %v1567 = vld [vmem:[%s361] sm:$0xf]
        %v1568 = vld [vmem:[%s361 + $0x4] sm:$0xf]
        %v1569 = vld [vmem:[%s361 + $0x8] sm:$0xf]
        %v1570 = vld [vmem:[%s361 + $0xc] sm:$0xf]
        %v1571 = vld [vmem:[%s361 + $0x10] sm:$0xf]
        %v1572 = vld [vmem:[%s361 + $0x14] sm:$0xf]
        %v1573 = vld [vmem:[%s361 + $0x18] sm:$0xf]
        %v1574 = vld [vmem:[%s361 + $0x1c] sm:$0xf]
        %v1575 = vld [vmem:[%s361 + $0x20] sm:$0xf]
        %v1576 = vld [vmem:[%s361 + $0x24] sm:$0xf]
        %v1577 = vld [vmem:[%s361 + $0x28] sm:$0xf]
        %v1578 = vld [vmem:[%s361 + $0x2c] sm:$0xf]
        %v1579 = vld [vmem:[%s361 + $0x30] sm:$0xf]
        %v1580 = vld [vmem:[%s361 + $0x34] sm:$0xf]
        %v1581 = vld [vmem:[%s361 + $0x38] sm:$0xf]
        %v1582 = vld [vmem:[%s361 + $0x3c] sm:$0xf]
        %v1583 = vld [vmem:[%s361 + $0x40] sm:$0xf]
        %v1584 = vld [vmem:[%s361 + $0x44] sm:$0xf]
        %v1585 = vld [vmem:[%s361 + $0x48] sm:$0xf]
        %v1586 = vld [vmem:[%s361 + $0x4c] sm:$0xf]
        %v1587 = vld [vmem:[%s361 + $0x50] sm:$0xf]
        %v1588 = vld [vmem:[%s361 + $0x54] sm:$0xf]
        %v1589 = vld [vmem:[%s361 + $0x58] sm:$0xf]
        %v1590 = vld [vmem:[%s361 + $0x5c] sm:$0xf]
        %v1591 = vld [vmem:[%s361 + $0x60] sm:$0xf]
        %v1592 = vld [vmem:[%s361 + $0x64] sm:$0xf]
        %v1593 = vld [vmem:[%s361 + $0x68] sm:$0xf]
        %v1594 = vld [vmem:[%s361 + $0x6c] sm:$0xf]
        %v1595 = vld [vmem:[%s361 + $0x70] sm:$0xf]
        %v1596 = vld [vmem:[%s361 + $0x74] sm:$0xf]
        %v1597 = vld [vmem:[%s361 + $0x78] sm:$0xf]
        %v1598 = vld [vmem:[%s361 + $0x7c] sm:$0xf]
        %v1631 = vunpack.c.l.b16 %v1567
        %v1632 = vunpack.c.l.b16 %v1568
        %v1633 = vunpack.c.l.b16 %v1569
        %v1634 = vunpack.c.l.b16 %v1570
        %v1635 = vunpack.c.l.b16 %v1571
        %v1636 = vunpack.c.l.b16 %v1572
        %v1637 = vunpack.c.l.b16 %v1573
        %v1638 = vunpack.c.l.b16 %v1574
        %v1639 = vunpack.c.l.b16 %v1575
        %v1640 = vunpack.c.l.b16 %v1576
        %v1641 = vunpack.c.l.b16 %v1577
        %v1642 = vunpack.c.l.b16 %v1578
        %v1643 = vunpack.c.l.b16 %v1579
        %v1644 = vunpack.c.l.b16 %v1580
        %v1645 = vunpack.c.l.b16 %v1581
        %v1646 = vunpack.c.l.b16 %v1582
        %v1647 = vunpack.c.l.b16 %v1583
        %v1648 = vunpack.c.l.b16 %v1584
        %v1649 = vunpack.c.l.b16 %v1585
        %v1650 = vunpack.c.l.b16 %v1586
        %v1651 = vunpack.c.l.b16 %v1587
        %v1652 = vunpack.c.l.b16 %v1588
        %v1653 = vunpack.c.l.b16 %v1589
        %v1654 = vunpack.c.l.b16 %v1590
        %v1655 = vunpack.c.l.b16 %v1591
        %v1656 = vunpack.c.l.b16 %v1592
        %v1657 = vunpack.c.l.b16 %v1593
        %v1658 = vunpack.c.l.b16 %v1594
        %v1659 = vunpack.c.l.b16 %v1595
        %v1660 = vunpack.c.l.b16 %v1596
        %v1661 = vunpack.c.l.b16 %v1597
        %v1662 = vunpack.c.l.b16 %v1598
        %v1663 = vpack.c.b16 %v1632, %v1631
        %v1664 = vpack.c.b16 %v1634, %v1633
        %v1665 = vpack.c.b16 %v1636, %v1635
        %v1666 = vpack.c.b16 %v1638, %v1637
        %v1667 = vpack.c.b16 %v1640, %v1639
        %v1668 = vpack.c.b16 %v1642, %v1641
        %v1669 = vpack.c.b16 %v1644, %v1643
        %v1670 = vpack.c.b16 %v1646, %v1645
        %v1671 = vpack.c.b16 %v1648, %v1647
        %v1672 = vpack.c.b16 %v1650, %v1649
        %v1673 = vpack.c.b16 %v1652, %v1651
        %v1674 = vpack.c.b16 %v1654, %v1653
        %v1675 = vpack.c.b16 %v1656, %v1655
        %v1676 = vpack.c.b16 %v1658, %v1657
        %v1677 = vpack.c.b16 %v1660, %v1659
        %v1678 = vpack.c.b16 %v1662, %v1661
        %1695 = vmatprep.subr.bf16.mxu0 0
        %1696 = vmatpush1.bf16.msra.mxu0 %v1663
        %1697 = vmatprep.subr.bf16.mxu0 0
        %1698 = vmatpush1.bf16.msra.mxu0 %v1664
        %1699 = vmatprep.subr.bf16.mxu0 0
        %1700 = vmatpush1.bf16.msra.mxu0 %v1665
        %1701 = vmatprep.subr.bf16.mxu0 0
        %1702 = vmatpush1.bf16.msra.mxu0 %v1666
        %1703 = vmatprep.subr.bf16.mxu0 0
        %1704 = vmatpush1.bf16.msra.mxu0 %v1667
        %1705 = vmatprep.subr.bf16.mxu0 0
        %1706 = vmatpush1.bf16.msra.mxu0 %v1668
        %1707 = vmatprep.subr.bf16.mxu0 0
        %1708 = vmatpush1.bf16.msra.mxu0 %v1669
        %1709 = vmatprep.subr.bf16.mxu0 0
        %1710 = vmatpush1.bf16.msra.mxu0 %v1670
        %1711 = vmatprep.subr.bf16.mxu0 0
        %1712 = vmatpush1.bf16.msra.mxu0 %v1671
        %1713 = vmatprep.subr.bf16.mxu0 0
        %1714 = vmatpush1.bf16.msra.mxu0 %v1672
        %1715 = vmatprep.subr.bf16.mxu0 0
        %1716 = vmatpush1.bf16.msra.mxu0 %v1673
        %1717 = vmatprep.subr.bf16.mxu0 0
        %1718 = vmatpush1.bf16.msra.mxu0 %v1674
        %1719 = vmatprep.subr.bf16.mxu0 0
        %1720 = vmatpush1.bf16.msra.mxu0 %v1675
        %1721 = vmatprep.subr.bf16.mxu0 0
        %1722 = vmatpush1.bf16.msra.mxu0 %v1676
        %1723 = vmatprep.subr.bf16.mxu0 0
        %1724 = vmatpush1.bf16.msra.mxu0 %v1677
        %1725 = vmatprep.subr.bf16.mxu0 0
        %1726 = vmatpush1.bf16.msra.mxu0 %v1678
        %1727 = vmatprep.mubr.bf16.mxu0 %v1472
        %1728 = vmatmul.mubr.bf16.gmra.mrb[0].mxu0 %v1471
        %v1729 = vpop.f32.mrb[0].mxu0
        %v1730 = vadd.f32 0.0, %v1729
        %v1731 = vpop.f32.mrb[0].mxu0
        %v1732 = vpop.f32.mrb[0].mxu0
        %v1733 = vadd.f32 0.0, %v1732
        %v1734 = vpop.f32.mrb[0].mxu0
        %1735 = vmatprep.mubr.bf16.mxu0 %v1474
        %1736 = vmatmul.mubr.bf16.gmra.mrb[0].mxu0 %v1473
        %v1737 = vpop.f32.mrb[0].mxu0
        %v1738 = vadd.f32 0.0, %v1737
        %v1739 = vpop.f32.mrb[0].mxu0
        %v1740 = vpop.f32.mrb[0].mxu0
        %v1741 = vadd.f32 0.0, %v1740
        %v1742 = vpop.f32.mrb[0].mxu0
        %1743 = vmatprep.mubr.bf16.mxu0 %v1476
        %1744 = vmatmul.mubr.bf16.gmra.mrb[0].mxu0 %v1475
        %v1745 = vpop.f32.mrb[0].mxu0
        %v1746 = vadd.f32 0.0, %v1745
        %v1747 = vpop.f32.mrb[0].mxu0
        %v1748 = vpop.f32.mrb[0].mxu0
        %v1749 = vadd.f32 0.0, %v1748
        %v1750 = vpop.f32.mrb[0].mxu0
        %1751 = vmatprep.mubr.bf16.mxu0 %v1478
        %1752 = vmatmul.mubr.bf16.gmra.mrb[0].mxu0 %v1477
        %v1753 = vpop.f32.mrb[0].mxu0
        %v1754 = vadd.f32 0.0, %v1753
        %v1755 = vpop.f32.mrb[0].mxu0
        %v1756 = vpop.f32.mrb[0].mxu0
        %v1757 = vadd.f32 0.0, %v1756
        %v1758 = vpop.f32.mrb[0].mxu0
        %1759 = vmatprep.mubr.bf16.mxu0 %v1480
        %1760 = vmatmul.mubr.bf16.gmra.mrb[0].mxu0 %v1479
        %v1761 = vpop.f32.mrb[0].mxu0
        %v1762 = vadd.f32 0.0, %v1761
        %v1763 = vpop.f32.mrb[0].mxu0
        %v1764 = vpop.f32.mrb[0].mxu0
        %v1765 = vadd.f32 0.0, %v1764
        %v1766 = vpop.f32.mrb[0].mxu0
        %1767 = vmatprep.mubr.bf16.mxu0 %v1482
        %1768 = vmatmul.mubr.bf16.gmra.mrb[0].mxu0 %v1481
        %v1769 = vpop.f32.mrb[0].mxu0
        %v1770 = vadd.f32 0.0, %v1769
        %v1771 = vpop.f32.mrb[0].mxu0
        %v1772 = vpop.f32.mrb[0].mxu0
        %v1773 = vadd.f32 0.0, %v1772
        %v1774 = vpop.f32.mrb[0].mxu0
        %1775 = vmatprep.mubr.bf16.mxu0 %v1484
        %1776 = vmatmul.mubr.bf16.gmra.mrb[0].mxu0 %v1483
        %v1777 = vpop.f32.mrb[0].mxu0
        %v1778 = vadd.f32 0.0, %v1777
        %v1779 = vpop.f32.mrb[0].mxu0
        %v1780 = vpop.f32.mrb[0].mxu0
        %v1781 = vadd.f32 0.0, %v1780
        %v1782 = vpop.f32.mrb[0].mxu0
        %1783 = vmatprep.mubr.bf16.mxu0 %v1486
        %1784 = vmatmul.mubr.bf16.gmra.mrb[0].mxu0 %v1485
        %v1785 = vpop.f32.mrb[0].mxu0
        %v1786 = vadd.f32 0.0, %v1785
        %v1787 = vpop.f32.mrb[0].mxu0
        %v1788 = vpop.f32.mrb[0].mxu0
        %v1789 = vadd.f32 0.0, %v1788
        %v1790 = vpop.f32.mrb[0].mxu0
        %1791 = vmatprep.mubr.bf16.mxu0 %v1488
        %1792 = vmatmul.mubr.bf16.gmra.mrb[0].mxu0 %v1487
        %v1793 = vpop.f32.mrb[0].mxu0
        %v1794 = vadd.f32 0.0, %v1793
        %v1795 = vpop.f32.mrb[0].mxu0
        %v1796 = vpop.f32.mrb[0].mxu0
        %v1797 = vadd.f32 0.0, %v1796
        %v1798 = vpop.f32.mrb[0].mxu0
        %1799 = vmatprep.mubr.bf16.mxu0 %v1490
        %1800 = vmatmul.mubr.bf16.gmra.mrb[0].mxu0 %v1489
        %v1801 = vpop.f32.mrb[0].mxu0
        %v1802 = vadd.f32 0.0, %v1801
        %v1803 = vpop.f32.mrb[0].mxu0
        %v1804 = vpop.f32.mrb[0].mxu0
        %v1805 = vadd.f32 0.0, %v1804
        %v1806 = vpop.f32.mrb[0].mxu0
        %1807 = vmatprep.mubr.bf16.mxu0 %v1492
        %1808 = vmatmul.mubr.bf16.gmra.mrb[0].mxu0 %v1491
        %v1809 = vpop.f32.mrb[0].mxu0
        %v1810 = vadd.f32 0.0, %v1809
        %v1811 = vpop.f32.mrb[0].mxu0
        %v1812 = vpop.f32.mrb[0].mxu0
        %v1813 = vadd.f32 0.0, %v1812
        %v1814 = vpop.f32.mrb[0].mxu0
        %1815 = vmatprep.mubr.bf16.mxu0 %v1494
        %1816 = vmatmul.mubr.bf16.gmra.mrb[0].mxu0 %v1493
        %v1817 = vpop.f32.mrb[0].mxu0
        %v1818 = vadd.f32 0.0, %v1817
        %v1819 = vpop.f32.mrb[0].mxu0
        %v1820 = vpop.f32.mrb[0].mxu0
        %v1821 = vadd.f32 0.0, %v1820
        %v1822 = vpop.f32.mrb[0].mxu0
        %1823 = vmatprep.mubr.bf16.mxu0 %v1496
        %1824 = vmatmul.mubr.bf16.gmra.mrb[0].mxu0 %v1495
        %v1825 = vpop.f32.mrb[0].mxu0
        %v1826 = vadd.f32 0.0, %v1825
        %v1827 = vpop.f32.mrb[0].mxu0
        %v1828 = vpop.f32.mrb[0].mxu0
        %v1829 = vadd.f32 0.0, %v1828
        %v1830 = vpop.f32.mrb[0].mxu0
        %1831 = vmatprep.mubr.bf16.mxu0 %v1498
        %1832 = vmatmul.mubr.bf16.gmra.mrb[0].mxu0 %v1497
        %v1833 = vpop.f32.mrb[0].mxu0
        %v1834 = vadd.f32 0.0, %v1833
        %v1835 = vpop.f32.mrb[0].mxu0
        %v1836 = vpop.f32.mrb[0].mxu0
        %v1837 = vadd.f32 0.0, %v1836
        %v1838 = vpop.f32.mrb[0].mxu0
        %1839 = vmatprep.mubr.bf16.mxu0 %v1500
        %1840 = vmatmul.mubr.bf16.gmra.mrb[0].mxu0 %v1499
        %v1841 = vpop.f32.mrb[0].mxu0
        %v1842 = vadd.f32 0.0, %v1841
        %v1843 = vpop.f32.mrb[0].mxu0
        %v1844 = vpop.f32.mrb[0].mxu0
        %v1845 = vadd.f32 0.0, %v1844
        %v1846 = vpop.f32.mrb[0].mxu0
        %1847 = vmatprep.mubr.bf16.mxu0 %v1502
        %1848 = vmatmul.mubr.bf16.gmra.mrb[0].mxu0 %v1501
        %v1849 = vpop.f32.mrb[0].mxu0
        %v1850 = vadd.f32 0.0, %v1849
        %v1851 = vpop.f32.mrb[0].mxu0
        %v1852 = vpop.f32.mrb[0].mxu0
        %v1853 = vadd.f32 0.0, %v1852
        %v1854 = vpop.f32.mrb[0].mxu0
        %1855 = vdwg.mxu0
        %s1856 = sld [smem:[#allocation2]]
        %v1857 = vstv %s1856
        %v1858 = vmul.f32 %v1857, %v1730
        %v1859 = vmul.f32 %v1857, %v1733
        %v1860 = vmul.f32 %v1857, %v1738
        %v1861 = vmul.f32 %v1857, %v1741
        %v1862 = vmul.f32 %v1857, %v1746
        %v1863 = vmul.f32 %v1857, %v1749
        %v1864 = vmul.f32 %v1857, %v1754
        %v1865 = vmul.f32 %v1857, %v1757
        %v1866 = vmul.f32 %v1857, %v1762
        %v1867 = vmul.f32 %v1857, %v1765
        %v1868 = vmul.f32 %v1857, %v1770
        %v1869 = vmul.f32 %v1857, %v1773
        %v1870 = vmul.f32 %v1857, %v1778
        %v1871 = vmul.f32 %v1857, %v1781
        %v1872 = vmul.f32 %v1857, %v1786
        %v1873 = vmul.f32 %v1857, %v1789
        %v1874 = vmul.f32 %v1857, %v1794
        %v1875 = vmul.f32 %v1857, %v1797
        %v1876 = vmul.f32 %v1857, %v1802
        %v1877 = vmul.f32 %v1857, %v1805
        %v1878 = vmul.f32 %v1857, %v1810
        %v1879 = vmul.f32 %v1857, %v1813
        %v1880 = vmul.f32 %v1857, %v1818
        %v1881 = vmul.f32 %v1857, %v1821
        %v1882 = vmul.f32 %v1857, %v1826
        %v1883 = vmul.f32 %v1857, %v1829
        %v1884 = vmul.f32 %v1857, %v1834
        %v1885 = vmul.f32 %v1857, %v1837
        %v1886 = vmul.f32 %v1857, %v1842
        %v1887 = vmul.f32 %v1857, %v1845
        %v1888 = vmul.f32 %v1857, %v1850
        %v1889 = vmul.f32 %v1857, %v1853
        %v1890 = vadd.f32 %v1858, %v374
        %v1891 = vadd.f32 %v1859, %v375
        %v1892 = vadd.f32 %v1860, %v376
        %v1893 = vadd.f32 %v1861, %v377
        %v1894 = vadd.f32 %v1862, %v378
        %v1895 = vadd.f32 %v1863, %v379
        %v1896 = vadd.f32 %v1864, %v380
        %v1897 = vadd.f32 %v1865, %v381
        %v1898 = vadd.f32 %v1866, %v382
        %v1899 = vadd.f32 %v1867, %v383
        %v1900 = vadd.f32 %v1868, %v384
        %v1901 = vadd.f32 %v1869, %v385
        %v1902 = vadd.f32 %v1870, %v386
        %v1903 = vadd.f32 %v1871, %v387
        %v1904 = vadd.f32 %v1872, %v388
        %v1905 = vadd.f32 %v1873, %v389
        %v1906 = vadd.f32 %v1874, %v390
        %v1907 = vadd.f32 %v1875, %v391
        %v1908 = vadd.f32 %v1876, %v392
        %v1909 = vadd.f32 %v1877, %v393
        %v1910 = vadd.f32 %v1878, %v394
        %v1911 = vadd.f32 %v1879, %v395
        %v1912 = vadd.f32 %v1880, %v396
        %v1913 = vadd.f32 %v1881, %v397
        %v1914 = vadd.f32 %v1882, %v398
        %v1915 = vadd.f32 %v1883, %v399
        %v1916 = vadd.f32 %v1884, %v400
        %v1917 = vadd.f32 %v1885, %v401
        %v1918 = vadd.f32 %v1886, %v402
        %v1919 = vadd.f32 %v1887, %v403
        %v1920 = vadd.f32 %v1888, %v404
        %v1921 = vadd.f32 %v1889, %v405
        %1922 = vst [vmem:[%s370] sm:$0xff] %v1890
        %1923 = vst [vmem:[%s370 + $0x8] sm:$0xff] %v1891
        %1924 = vst [vmem:[%s370 + $0x10] sm:$0xff] %v1892
        %1925 = vst [vmem:[%s370 + $0x18] sm:$0xff] %v1893
        %1926 = vst [vmem:[%s370 + $0x20] sm:$0xff] %v1894
        %1927 = vst [vmem:[%s370 + $0x28] sm:$0xff] %v1895
        %1928 = vst [vmem:[%s370 + $0x30] sm:$0xff] %v1896
        %1929 = vst [vmem:[%s370 + $0x38] sm:$0xff] %v1897
        %1930 = vst [vmem:[%s370 + $0x40] sm:$0xff] %v1898
        %1931 = vst [vmem:[%s370 + $0x48] sm:$0xff] %v1899
        %1932 = vst [vmem:[%s370 + $0x50] sm:$0xff] %v1900
        %1933 = vst [vmem:[%s370 + $0x58] sm:$0xff] %v1901
        %1934 = vst [vmem:[%s370 + $0x60] sm:$0xff] %v1902
        %1935 = vst [vmem:[%s370 + $0x68] sm:$0xff] %v1903
        %1936 = vst [vmem:[%s370 + $0x70] sm:$0xff] %v1904
        %1937 = vst [vmem:[%s370 + $0x78] sm:$0xff] %v1905
        %1938 = vst [vmem:[%s370 + $0x80] sm:$0xff] %v1906
        %1939 = vst [vmem:[%s370 + $0x88] sm:$0xff] %v1907
        %1940 = vst [vmem:[%s370 + $0x90] sm:$0xff] %v1908
        %1941 = vst [vmem:[%s370 + $0x98] sm:$0xff] %v1909
        %1942 = vst [vmem:[%s370 + $0xa0] sm:$0xff] %v1910
        %1943 = vst [vmem:[%s370 + $0xa8] sm:$0xff] %v1911
        %1944 = vst [vmem:[%s370 + $0xb0] sm:$0xff] %v1912
        %1945 = vst [vmem:[%s370 + $0xb8] sm:$0xff] %v1913
        %1946 = vst [vmem:[%s370 + $0xc0] sm:$0xff] %v1914
        %1947 = vst [vmem:[%s370 + $0xc8] sm:$0xff] %v1915
        %1948 = vst [vmem:[%s370 + $0xd0] sm:$0xff] %v1916
        %1949 = vst [vmem:[%s370 + $0xd8] sm:$0xff] %v1917
        %1950 = vst [vmem:[%s370 + $0xe0] sm:$0xff] %v1918
        %1951 = vst [vmem:[%s370 + $0xe8] sm:$0xff] %v1919
        %1952 = vst [vmem:[%s370 + $0xf0] sm:$0xff] %v1920
        %1953 = vst [vmem:[%s370 + $0xf8] sm:$0xff] %v1921
        %s1954 = smul.u32 32, %s28
        %p1955 = scmp.lt.s32.totalorder %s27, 1
        %s1956 = scalar_select %p1955, %s27, 1
        %p1957 = scmp.lt.s32.totalorder %s1954, 31
        %s1958 = scalar_select %p1957, %s1954, 31
        %s1959 = smul.addr %s1956, 32
        %s1960 = sadd.s32 %s1958, %s1959
        %s1961 = smul.addr %s1960, 8
        %s1962 = scalar_lea.vmem %s6, %s1961
        %s1963 = sand.u32 %s216, 1
        %s1964 = scalar_lea.sflag [#allocation4], %s1963
        %s1965 = sand.u32 %s216, 1
        %s1966 = smul.addr %s1965, 512
        %s1967 = scalar_lea.vmem [#allocation3], %s1966
        // Predicated region
        $region45: #{self_attn_pallas.1} parent=43 // pred_check
          %p1968 = pneg %p198
        $region46: #{self_attn_pallas.1} parent=43 // pred_check_branch
          %1970 = sbr.rel (%p1968) target = $region48
        $region47: #{self_attn_pallas.1} parent=43 // pred_region
          %s1971 = smul.u32 32, %s28
        $region48: #{self_attn_pallas.1} parent=43 // pred_fallthru
          _
        // Predicated region
        $region49: #{self_attn_pallas.1} parent=43 // pred_check
          %p1972 = pneg %p226
        $region50: #{self_attn_pallas.1} parent=43 // pred_check_branch
          %1974 = sbr.rel (%p1972) target = $region52
        $region51: #{self_attn_pallas.1} parent=43 // pred_region
          %s1975 = smul.u32 32, %s28
          %s1977 = ssub.s32 8192, 8192
          %1978 = vsyncadd %s1964, %s1977
          %s1979 = smul.addr %s1975, 2
          %s1980 = smul.addr %s27, 64
          %s1981 = sadd.s32 %s1979, %s1980
          %s1982 = smul.addr %s1981, 128
          %s1983 = scalar_lea.hbm %s7, %s1982
          %s1984 = sshll.u32 %s1967, 4
          %s1985 = int_to_ptr.vmem [resolvable:$true] %s1984
          %1990 = dma.vmem_to_hbm [thread:$0]  %s1985, 8192, %s1983, %s1964, 256, 256, 16
        $region52: #{self_attn_pallas.1} parent=43 // pred_fallthru
          _
      $region44: #{self_attn_pallas.1} parent=5 // pred_fallthru
        _
      %p1991 = scmp.le.s32.totalorder 2, %s18
      // Predicated region
      $region53: #{self_attn_pallas.1} parent=5 // pred_check
        %p1992 = pneg %p1991
      $region54: #{self_attn_pallas.1} parent=5 // pred_check_branch
        %1994 = sbr.rel (%p1992) target = $region56
      $region55: #{self_attn_pallas.1} parent=5 // pred_region
        %s1995 = ssub.s32 %s18, 2
        // Predicated region
        $region57: #{self_attn_pallas.1} parent=55 // pred_check
          %p1996 = pneg %p204
        $region58: #{self_attn_pallas.1} parent=55 // pred_check_branch
          %1998 = sbr.rel (%p1996) target = $region60
        $region59: #{self_attn_pallas.1} parent=55 // pred_region
          %s1999 = smul.u32 32, %s30
          %p2000 = scmp.lt.s32.totalorder %s29, 1
          %s2001 = scalar_select %p2000, %s29, 1
          %p2002 = scmp.lt.s32.totalorder %s1999, 31
          %s2003 = scalar_select %p2002, %s1999, 31
          %s2004 = smul.addr %s2001, 32
          %s2005 = sadd.s32 %s2003, %s2004
          %s2006 = smul.addr %s2005, 8
          %s2007 = scalar_lea.vmem %s6, %s2006
        $region60: #{self_attn_pallas.1} parent=55 // pred_fallthru
          _
        // Predicated region
        $region61: #{self_attn_pallas.1} parent=55 // pred_check
          %p2008 = pneg %p232
        $region62: #{self_attn_pallas.1} parent=55 // pred_check_branch
          %2010 = sbr.rel (%p2008) target = $region64
        $region63: #{self_attn_pallas.1} parent=55 // pred_region
          %s2011 = sand.u32 %s217, 1
          %s2012 = scalar_lea.sflag [#allocation4], %s2011
          %s2013 = sand.u32 %s217, 1
          %s2014 = smul.addr %s2013, 512
          %s2015 = scalar_lea.vmem [#allocation3], %s2014
          %2016 = dma.done %s2012, 8192
        $region64: #{self_attn_pallas.1} parent=55 // pred_fallthru
          _
      $region56: #{self_attn_pallas.1} parent=5 // pred_fallthru
        _
    $region6: #{self_attn_pallas.1} parent=1 // loop_footer
      %s22 = sadd.s32 1, %s18
    $region7: #{self_attn_pallas.1} parent=1 // loop_footer_branch
      %17 = sbr.rel target = $region3
    $region8: #{self_attn_pallas.1} parent=1 // loop_exit
      _
    %2017 = vsyncpa [#allocation4], 1
    %s2018 = scalar_lea.sflag [#allocation4], 1
    %2019 = vsyncpa %s2018, 1

</llo_original>
